<compile_context>
chip_gen: v7x
topology: tpu7x:2x2x1
jax: 0.10.0
libtpu: 0.0.40
codegen_flags: <defaults>
</compile_context>

<pallas_src>
import functools

import jax
import jax.numpy as jnp
import numpy as np
from jax.experimental import pallas as pl
from jax.experimental.pallas import tpu as pltpu


def _ceil8(c):
    return ((c + 7) // 8) * 8


def _vmem_limit_bytes():
    """~3/4 of physical VMEM: ~48 MiB on v7x (64 MiB/TC), ~96 MiB on v5e/v6e (128 MiB)."""
    try:
        cap = getattr(pltpu.get_tpu_info(), "vmem_capacity_bytes", None)
        if cap:
            return min(int(cap) * 3 // 4, 112 * 1024 * 1024)
    except Exception:
        pass
    return 48 * 1024 * 1024


_VMEM_LIMIT = _vmem_limit_bytes()


# ---------------------------------------------------------------------------
# Kernel 1: ConvTranspose2d(kernel=2, stride=2) as ONE bf16 matmul for the whole batch.
#   x_ref : (Cin, N*Hx*Wx) f32      w_ref : (4*Cout, Cin) bf16, rows ordered (ky, kx, co)
#   b_ref : (4*Cout, 1) f32         o_ref : (4*Cout, N*Hx*Wx) bf16
# ---------------------------------------------------------------------------
def _upsample_kernel(x_ref, w_ref, b_ref, o_ref):
    y = jnp.dot(w_ref[...], x_ref[...].astype(jnp.bfloat16),
                preferred_element_type=jnp.float32)
    o_ref[...] = (y + b_ref[...]).astype(o_ref.dtype)


# ---------------------------------------------------------------------------
# Kernel 2: fused  [pad + concat + Conv3x3 + LayerNorm([C,H,W]) + ReLU] x 2
# per sample, channel-first flat-spatial layout (C, P) with P = H*W.
#   br_ref   : (1, Cb,  P) f32   bridge (skip connection)
#   y_ref    : (1, Cy,  P) bf16  upsampled (+F.pad'ed) map
#   mask_ref : (9, P)      bf16  per-tap edge-validity masks (conv zero padding)
#   w1_ref   : (Cy, K1) bf16, K1 = 9*(Cbp+Cyp)   b1(f32) / g1,bt1(bf16) : conv1 bias / LN1
#   w2_ref   : (Cy, K2) bf16, K2 = 9*Cyp         b2(f32) / g2,bt2(bf16) : conv2 bias / LN2
#   o_ref    : (1, Cy, P) f32
#   col1/col2: bf16 VMEM im2col scratch (K1, P) / (K2, P)  (persistent across grid steps)
# ---------------------------------------------------------------------------
def _convblock_kernel(br_ref, y_ref, mask_ref,
                      w1_ref, b1_ref, g1_ref, bt1_ref,
                      w2_ref, b2_ref, g2_ref, bt2_ref,
                      o_ref, col1_ref, col2_ref,
                      *, W, Cb, Cy, Cbp, Cyp, eps):
    P = col1_ref.shape[1]
    inv_n = 1.0 / float(Cy * P)
    y_rows0 = 9 * Cbp

    # Channel-padding rows must be zero (their weight columns are zero too, but scratch
    # is uninitialised and NaN * 0 = NaN).  Scratch persists across grid iterations and
    # nothing else writes these rows, so zero them exactly once.
    if (Cbp != Cb) or (Cyp != Cy):
        @pl.when(pl.program_id(0) == 0)
        def _init_padding_rows():
            for t in range(9):
                if Cbp != Cb:
                    col1_ref[t * Cbp + Cb:(t + 1) * Cbp, :] = jnp.zeros(
                        (Cbp - Cb, P), dtype=col1_ref.dtype)
                if Cyp != Cy:
                    col1_ref[y_rows0 + t * Cyp + Cy:y_rows0 + (t + 1) * Cyp, :] = \
                        jnp.zeros((Cyp - Cy, P), dtype=col1_ref.dtype)
                    col2_ref[t * Cyp + Cy:(t + 1) * Cyp, :] = jnp.zeros(
                        (Cyp - Cy, P), dtype=col2_ref.dtype)

    br = br_ref[0]                              # (Cb, P) f32
    yy = y_ref[0].astype(jnp.float32)           # (Cy, P) bf16 -> f32 (tap math in f32)

    def tap(v, t, m):
        # conv input shifted by tap t = (dy, dx); zero outside the image (mask).
        dy, dx = divmod(t, 3)
        s = (dy - 1) * W + (dx - 1)             # flat lane shift of this tap
        if s != 0:
            v = pltpu.roll(v, (-s) % P, 1)      # out[p] = v[p + s] (wraps are masked)
        if t != 4:                              # center tap: mask is all ones, skip it
            v = v * m                           # f32 * bf16(0/1) -> f32, exact
        return v.astype(jnp.bfloat16)           # bf16 store into the bf16 im2col scratch

    def layernorm_relu(z, g_ref_, bt_ref_):
        # Two-pass-on-registers LN over the whole (C, H*W) slab (biased var, as torch).
        mean = jnp.sum(z) * inv_n
        d = z - mean
        var = jnp.sum(d * d) * inv_n
        zn = d * jax.lax.rsqrt(var + eps)
        return jnp.maximum(zn * g_ref_[...] + bt_ref_[...], 0.0)   # affine in bf16->f32

    # ---- conv1 im2col: [9 bridge tap blocks | 9 upsample tap blocks] -------------
    for t in range(9):
        m = mask_ref[t:t + 1, :] if t != 4 else None
        col1_ref[t * Cbp:t * Cbp + Cb, :] = tap(br, t, m)
        col1_ref[y_rows0 + t * Cyp:y_rows0 + t * Cyp + Cy, :] = tap(yy, t, m)

    h1 = jnp.dot(w1_ref[...], col1_ref[...],
                 preferred_element_type=jnp.float32) + b1_ref[...]
    h1 = layernorm_relu(h1, g1_ref, bt1_ref)

    # ---- conv2 --------------------------------------------------------------------
    for t in range(9):
        m = mask_ref[t:t + 1, :] if t != 4 else None
        col2_ref[t * Cyp:t * Cyp + Cy, :] = tap(h1, t, m)

    h2 = jnp.dot(w2_ref[...], col2_ref[...],
                 preferred_element_type=jnp.float32) + b2_ref[...]
    h2 = layernorm_relu(h2, g2_ref, bt2_ref)

    o_ref[0] = h2.astype(o_ref.dtype)           # lane-dense: last dim = H*W


# ---------------------------------------------------------------------------
# Wrapper helpers
# ---------------------------------------------------------------------------
def _tap_masks(H, W):
    """(9, H*W) bf16: 1.0 where the (dy,dx)-shifted pixel is inside the image."""
    hh = np.arange(H)[:, None]
    ww = np.arange(W)[None, :]
    out = []
    for dy in range(3):
        for dx in range(3):
            valid = ((hh + dy - 1 >= 0) & (hh + dy - 1 < H) &
                     (ww + dx - 1 >= 0) & (ww + dx - 1 < W))
            out.append(valid.astype(np.float32).reshape(H * W))
    return jnp.asarray(np.stack(out, axis=0), dtype=jnp.bfloat16)


def _conv_weight_cf(w_oihw, cpad):
    """torch (Cout, Cin, 3, 3) -> (Cout, 9*cpad) bf16, columns ordered (dy, dx, ci)."""
    co, ci = w_oihw.shape[0], w_oihw.shape[1]
    w = jnp.transpose(w_oihw, (0, 2, 3, 1))                       # (Cout, 3, 3, Cin)
    w = jnp.pad(w, ((0, 0), (0, 0), (0, 0), (0, cpad - ci)))
    return w.reshape(co, 9 * cpad).astype(jnp.bfloat16)


# ---------------------------------------------------------------------------
# UpBlock forward (public interface: NCHW in, NCHW out)
# ---------------------------------------------------------------------------
def upblock_forward(x_nchw, bridge_nchw, params, eps=1e-5):
    """x: (N, Cin, Hx, Wx), bridge: (N, Cb, Hb, Wb) -> (N, Cout, Hb, Wb)."""
    N, Cin, Hx, Wx = x_nchw.shape
    _, Cb, Hb, Wb = bridge_nchw.shape
    Cout = params["w_up"].shape[1]
    P = Hb * Wb

    # ---------------- ConvTranspose2d(k=2, s=2) -------------------------------------
    # One cheap XLA transpose of the SMALL pre-upsample map buys a single fat matmul
    # with lane width N*Hx*Wx (>= 128) and no per-sample grid overhead.
    w_all = (jnp.transpose(params["w_up"], (2, 3, 1, 0))          # rows (ky, kx, co)
             .reshape(4 * Cout, Cin).astype(jnp.bfloat16))
    b_all = jnp.tile(params["b_up"], 4).reshape(4 * Cout, 1)
    x_cf = jnp.transpose(x_nchw, (1, 0, 2, 3)).reshape(Cin, N * Hx * Wx)

    up = pl.pallas_call(
        _upsample_kernel,
        out_shape=jax.ShapeDtypeStruct((4 * Cout, N * Hx * Wx), jnp.bfloat16),
        grid_spec=pltpu.PrefetchScalarGridSpec(
            num_scalar_prefetch=0,
            grid=(1,),
            in_specs=[
                pl.BlockSpec((Cin, N * Hx * Wx), lambda i: (0, 0)),
                pl.BlockSpec((4 * Cout, Cin), lambda i: (0, 0)),
                pl.BlockSpec((4 * Cout, 1), lambda i: (0, 0)),
            ],
            out_specs=pl.BlockSpec((4 * Cout, N * Hx * Wx), lambda i: (0, 0)),
        ),
        compiler_params=pltpu.CompilerParams(
            dimension_semantics=("arbitrary",),
            vmem_limit_bytes=_VMEM_LIMIT),
    )(x_cf, w_all, b_all)

    # 2x2 pixel-shuffle interleave + F.pad: single fused XLA copy pass (now bf16) over
    # the small upsampled map.  Stride-2 scatter is not expressible as a contiguous
    # BlockSpec block (last-two-dims rule), hence it stays outside the Pallas kernels.
    y = up.reshape(2, 2, Cout, N, Hx, Wx)                         # (ky, kx, co, n, h, w)
    y = jnp.transpose(y, (3, 2, 4, 0, 5, 1)).reshape(N, Cout, 2 * Hx, 2 * Wx)
    dY, dX = Hb - 2 * Hx, Wb - 2 * Wx
    y = jnp.pad(y, ((0, 0), (0, 0), (dY // 2, dY - dY // 2), (dX // 2, dX - dX // 2)))
    y2d = y.reshape(N, Cout, P)                                   # bf16, free reshape
    bridge2d = bridge_nchw.reshape(N, Cb, P)                      # f32, free reshape

    # ---------------- fused ConvBlock ------------------------------------------------
    Cbp, Cyp = _ceil8(Cb), _ceil8(Cout)
    K1, K2 = 9 * (Cbp + Cyp), 9 * Cyp

    w1 = params["w1"]                                             # (Cout, Cb+Cout, 3, 3)
    w1T = jnp.concatenate(
        [_conv_weight_cf(w1[:, :Cb], Cbp), _conv_weight_cf(w1[:, Cb:], Cyp)], axis=1)
    w2T = _conv_weight_cf(params["w2"], Cyp)
    b1 = params["b1"].reshape(Cout, 1)
    b2 = params["b2"].reshape(Cout, 1)
    # Resident broadcast slabs shipped in bf16 (LN math itself stays f32 in-kernel).
    g1 = params["g1"].reshape(Cout, P).astype(jnp.bfloat16)
    bt1 = params["bt1"].reshape(Cout, P).astype(jnp.bfloat16)
    g2 = params["g2"].reshape(Cout, P).astype(jnp.bfloat16)
    bt2 = params["bt2"].reshape(Cout, P).astype(jnp.bfloat16)
    masks = _tap_masks(Hb, Wb)

    kernel = functools.partial(
        _convblock_kernel, W=Wb, Cb=Cb, Cy=Cout, Cbp=Cbp, Cyp=Cyp, eps=eps)
    bcast = lambda n: (0, 0)
    per_n = lambda n: (n, 0, 0)

    out2d = pl.pallas_call(
        kernel,
        out_shape=jax.ShapeDtypeStruct((N, Cout, P), jnp.float32),
        grid_spec=pltpu.PrefetchScalarGridSpec(
            num_scalar_prefetch=0,
            grid=(N,),
            in_specs=[
                pl.BlockSpec((1, Cb, P), per_n),        # bridge (f32)
                pl.BlockSpec((1, Cout, P), per_n),      # upsampled (+F.pad) map (bf16)
                pl.BlockSpec((9, P), bcast),            # conv tap edge masks (bf16)
                pl.BlockSpec((Cout, K1), bcast),        # conv1 weights (bf16)
                pl.BlockSpec((Cout, 1), bcast),         # conv1 bias (f32)
                pl.BlockSpec((Cout, P), bcast),         # LN1 gamma (bf16)
                pl.BlockSpec((Cout, P), bcast),         # LN1 beta (bf16)
                pl.BlockSpec((Cout, K2), bcast),        # conv2 weights (bf16)
                pl.BlockSpec((Cout, 1), bcast),         # conv2 bias (f32)
                pl.BlockSpec((Cout, P), bcast),         # LN2 gamma (bf16)
                pl.BlockSpec((Cout, P), bcast),         # LN2 beta (bf16)
            ],
            out_specs=pl.BlockSpec((1, Cout, P), per_n),
            scratch_shapes=[
                pltpu.VMEM((K1, P), jnp.bfloat16),      # conv1 im2col (bf16)
                pltpu.VMEM((K2, P), jnp.bfloat16),      # conv2 im2col (bf16)
            ],
        ),
        compiler_params=pltpu.CompilerParams(
            dimension_semantics=("parallel",),
            vmem_limit_bytes=_VMEM_LIMIT),
    )(bridge2d, y2d, masks, w1T, b1, g1, bt1, w2T, b2, g2, bt2)

    return out2d.reshape(N, Cout, Hb, Wb)                         # free reshape, NCHW


# ---------------------------------------------------------------------------
# Deterministic parameter init (shapes follow the PyTorch module __init__).
# ---------------------------------------------------------------------------
def init_params(key, in_channels, bridge_channels, out_channels, spatial_dims):
    H, W = spatial_dims
    comb = out_channels + bridge_channels
    ks = jax.random.split(key, 10)
    s = 0.1
    return {
        # ConvTranspose2d(in_channels, out_channels, k=2, s=2): weight (Cin, Cout, 2, 2)
        "w_up": s * jax.random.normal(ks[0], (in_channels, out_channels, 2, 2), jnp.float32),
        "b_up": s * jax.random.normal(ks[1], (out_channels,), jnp.float32),
        # ConvBlock.conv1: (Cout, comb, 3, 3)
        "w1": s * jax.random.normal(ks[2], (out_channels, comb, 3, 3), jnp.float32),
        "b1": s * jax.random.normal(ks[3], (out_channels,), jnp.float32),
        # LayerNorm([Cout, H, W])
        "g1": 1.0 + s * jax.random.normal(ks[4], (out_channels, H, W), jnp.float32),
        "bt1": s * jax.random.normal(ks[5], (out_channels, H, W), jnp.float32),
        # ConvBlock.conv2: (Cout, Cout, 3, 3)
        "w2": s * jax.random.normal(ks[6], (out_channels, out_channels, 3, 3), jnp.float32),
        "b2": s * jax.random.normal(ks[7], (out_channels,), jnp.float32),
        "g2": 1.0 + s * jax.random.normal(ks[8], (out_channels, H, W), jnp.float32),
        "bt2": s * jax.random.normal(ks[9], (out_channels, H, W), jnp.float32),
    }


if __name__ == "__main__":
    # Small UpBlock: upsample x (N, 8, 8, 8) by 2 -> merge with bridge (N, 4, 16, 16)
    N = 2
    in_channels = 8
    bridge_channels = 4
    out_channels = 4
    spatial_dims = (16, 16)   # output spatial dims (= bridge spatial dims)

    key = jax.random.PRNGKey(0)
    k_x, k_b, k_p = jax.random.split(key, 3)

    x = jax.random.normal(k_x, (N, in_channels, 8, 8), jnp.float32)
    bridge = jax.random.normal(k_b, (N, bridge_channels, 16, 16), jnp.float32)
    params = init_params(k_p, in_channels, bridge_channels, out_channels, spatial_dims)

    out = jax.jit(upblock_forward)(x, bridge, params)
    out = jax.block_until_ready(out)

    assert out.shape == (N, out_channels, spatial_dims[0], spatial_dims[1]), out.shape
    assert bool(jnp.all(jnp.isfinite(out)))
    print("KERNEL_OK")
</pallas_src>

<mosaic_0001>
module attributes {stable_mosaic.version = 11 : i64} {
  func.func @_upsample_kernel(%arg0: i32, %arg1: memref<8x128xf32, #tpu.memory_space<vmem>>, %arg2: memref<16x8xbf16, #tpu.memory_space<vmem>>, %arg3: memref<16x1xf32, #tpu.memory_space<vmem>>, %arg4: memref<16x128xbf16, #tpu.memory_space<vmem>>) attributes {dimension_semantics = [#tpu.dimension_semantics<arbitrary>], iteration_bounds = array<i64: 1>, scalar_prefetch = 0 : i64, scratch_operands = 0 : i64, tpu.core_type = #tpu.core_type<tc>, window_params = [{pipeline_mode = #tpu.pipeline_mode<synchronous>, transform_indices = @transform_0, window_bounds = array<i64: 8, 128>}, {pipeline_mode = #tpu.pipeline_mode<synchronous>, transform_indices = @transform_1, window_bounds = array<i64: 16, 8>}, {pipeline_mode = #tpu.pipeline_mode<synchronous>, transform_indices = @transform_2, window_bounds = array<i64: 16, 1>}, {pipeline_mode = #tpu.pipeline_mode<synchronous>, transform_indices = @transform_3, window_bounds = array<i64: 16, 128>}]} {
    %c0 = arith.constant 0 : index
    %c0_0 = arith.constant 0 : index
    %0 = vector.load %arg2[%c0, %c0_0] : memref<16x8xbf16, #tpu.memory_space<vmem>>, vector<16x8xbf16>
    %c0_1 = arith.constant 0 : index
    %c0_2 = arith.constant 0 : index
    %1 = vector.load %arg1[%c0_1, %c0_2] : memref<8x128xf32, #tpu.memory_space<vmem>>, vector<8x128xf32>
    %2 = arith.truncf %1 : vector<8x128xf32> to vector<8x128xbf16>
    %cst = arith.constant dense<0.000000e+00> : vector<16x128xf32>
    %3 = tpu.matmul %0, %2, %cst {dimension_numbers = #tpu.dot_dimension_numbers<[1], [0], [0], [1], [0, 0, 1, 1], [], []>} : vector<16x8xbf16>, vector<8x128xbf16>, vector<16x128xf32> -> vector<16x128xf32>
    %c0_3 = arith.constant 0 : index
    %c0_4 = arith.constant 0 : index
    %4 = vector.load %arg3[%c0_3, %c0_4] : memref<16x1xf32, #tpu.memory_space<vmem>>, vector<16x1xf32>
    %5 = vector.broadcast %4 : vector<16x1xf32> to vector<16x128xf32>
    %6 = arith.addf %3, %5 : vector<16x128xf32>
    %7 = arith.truncf %6 : vector<16x128xf32> to vector<16x128xbf16>
    %c0_5 = arith.constant 0 : index
    %c0_6 = arith.constant 0 : index
    %8 = vector.load %arg4[%c0_5, %c0_6] : memref<16x128xbf16, #tpu.memory_space<vmem>>, vector<16x128xbf16>
    tpu.vector_store %arg4[%c0_5, %c0_6], %7 {strides = array<i32>} : memref<16x128xbf16, #tpu.memory_space<vmem>>, vector<16x128xbf16>,
    return
  }
  func.func @transform_0(%arg0: i32) -> (i32, i32) {
    %c0_i32 = arith.constant 0 : i32
    %c0_i32_0 = arith.constant 0 : i32
    %c0_i32_1 = arith.constant 0 : i32
    return %c0_i32, %c0_i32_0 : i32, i32
  }
  func.func @transform_1(%arg0: i32) -> (i32, i32) {
    %c0_i32 = arith.constant 0 : i32
    %c0_i32_0 = arith.constant 0 : i32
    %c0_i32_1 = arith.constant 0 : i32
    return %c0_i32, %c0_i32_0 : i32, i32
  }
  func.func @transform_2(%arg0: i32) -> (i32, i32) {
    %c0_i32 = arith.constant 0 : i32
    %c0_i32_0 = arith.constant 0 : i32
    %c0_i32_1 = arith.constant 0 : i32
    return %c0_i32, %c0_i32_0 : i32, i32
  }
  func.func @transform_3(%arg0: i32) -> (i32, i32) {
    %c0_i32 = arith.constant 0 : i32
    %c0_i32_0 = arith.constant 0 : i32
    %c0_i32_1 = arith.constant 0 : i32
    return %c0_i32, %c0_i32_0 : i32, i32
  }
}

module attributes {stable_mosaic.version = 11 : i64} {
  func.func @_convblock_kernel(%arg0: i32, %arg1: memref<1x4x256xf32, #tpu.memory_space<vmem>>, %arg2: memref<1x4x256xbf16, #tpu.memory_space<vmem>>, %arg3: memref<9x256xbf16, #tpu.memory_space<vmem>>, %arg4: memref<4x144xbf16, #tpu.memory_space<vmem>>, %arg5: memref<4x1xf32, #tpu.memory_space<vmem>>, %arg6: memref<4x256xbf16, #tpu.memory_space<vmem>>, %arg7: memref<4x256xbf16, #tpu.memory_space<vmem>>, %arg8: memref<4x72xbf16, #tpu.memory_space<vmem>>, %arg9: memref<4x1xf32, #tpu.memory_space<vmem>>, %arg10: memref<4x256xbf16, #tpu.memory_space<vmem>>, %arg11: memref<4x256xbf16, #tpu.memory_space<vmem>>, %arg12: memref<1x4x256xf32, #tpu.memory_space<vmem>>, %arg13: memref<144x256xbf16, #tpu.memory_space<vmem>>, %arg14: memref<72x256xbf16, #tpu.memory_space<vmem>>) attributes {dimension_semantics = [#tpu.dimension_semantics<parallel>], iteration_bounds = array<i64: 2>, scalar_prefetch = 0 : i64, scratch_operands = 2 : i64, tpu.core_type = #tpu.core_type<tc>, window_params = [{transform_indices = @transform_0, window_bounds = array<i64: 1, 4, 256>}, {transform_indices = @transform_1, window_bounds = array<i64: 1, 4, 256>}, {pipeline_mode = #tpu.pipeline_mode<synchronous>, transform_indices = @transform_2, window_bounds = array<i64: 9, 256>}, {pipeline_mode = #tpu.pipeline_mode<synchronous>, transform_indices = @transform_3, window_bounds = array<i64: 4, 144>}, {pipeline_mode = #tpu.pipeline_mode<synchronous>, transform_indices = @transform_4, window_bounds = array<i64: 4, 1>}, {pipeline_mode = #tpu.pipeline_mode<synchronous>, transform_indices = @transform_5, window_bounds = array<i64: 4, 256>}, {pipeline_mode = #tpu.pipeline_mode<synchronous>, transform_indices = @transform_6, window_bounds = array<i64: 4, 256>}, {pipeline_mode = #tpu.pipeline_mode<synchronous>, transform_indices = @transform_7, window_bounds = array<i64: 4, 72>}, {pipeline_mode = #tpu.pipeline_mode<synchronous>, transform_indices = @transform_8, window_bounds = array<i64: 4, 1>}, {pipeline_mode = #tpu.pipeline_mode<synchronous>, transform_indices = @transform_9, window_bounds = array<i64: 4, 256>}, {pipeline_mode = #tpu.pipeline_mode<synchronous>, transform_indices = @transform_10, window_bounds = array<i64: 4, 256>}, {transform_indices = @transform_11, window_bounds = array<i64: 1, 4, 256>}]} {
    %c0_i32 = arith.constant 0 : i32
    %0 = arith.cmpi eq, %arg0, %c0_i32 : i32
    %1 = arith.extui %0 : i1 to i32
    %c0_i32_0 = arith.constant 0 : i32
    %2 = arith.cmpi ne, %1, %c0_i32_0 : i32
    scf.if %2 {
      %cst_121 = arith.constant 0.000000e+00 : bf16
      %239 = vector.broadcast %cst_121 : bf16 to vector<4x256xbf16>
      %c4 = arith.constant 4 : index
      %c0_122 = arith.constant 0 : index
      %240 = vector.load %arg13[%c4, %c0_122] : memref<144x256xbf16, #tpu.memory_space<vmem>>, vector<4x256xbf16>
      tpu.vector_store %arg13[%c4, %c0_122], %239 {strides = array<i32>} : memref<144x256xbf16, #tpu.memory_space<vmem>>, vector<4x256xbf16>,
      %cst_123 = arith.constant 0.000000e+00 : bf16
      %241 = vector.broadcast %cst_123 : bf16 to vector<4x256xbf16>
      %c76 = arith.constant 76 : index
      %c0_124 = arith.constant 0 : index
      %242 = vector.load %arg13[%c76, %c0_124] : memref<144x256xbf16, #tpu.memory_space<vmem>>, vector<4x256xbf16>
      tpu.vector_store %arg13[%c76, %c0_124], %241 {strides = array<i32>} : memref<144x256xbf16, #tpu.memory_space<vmem>>, vector<4x256xbf16>,
      %cst_125 = arith.constant 0.000000e+00 : bf16
      %243 = vector.broadcast %cst_125 : bf16 to vector<4x256xbf16>
      %c4_126 = arith.constant 4 : index
      %c0_127 = arith.constant 0 : index
      %244 = vector.load %arg14[%c4_126, %c0_127] : memref<72x256xbf16, #tpu.memory_space<vmem>>, vector<4x256xbf16>
      tpu.vector_store %arg14[%c4_126, %c0_127], %243 {strides = array<i32>} : memref<72x256xbf16, #tpu.memory_space<vmem>>, vector<4x256xbf16>,
      %cst_128 = arith.constant 0.000000e+00 : bf16
      %245 = vector.broadcast %cst_128 : bf16 to vector<4x256xbf16>
      %c12 = arith.constant 12 : index
      %c0_129 = arith.constant 0 : index
      %246 = vector.load %arg13[%c12, %c0_129] : memref<144x256xbf16, #tpu.memory_space<vmem>>, vector<4x256xbf16>
      tpu.vector_store %arg13[%c12, %c0_129], %245 {strides = array<i32>} : memref<144x256xbf16, #tpu.memory_space<vmem>>, vector<4x256xbf16>,
      %cst_130 = arith.constant 0.000000e+00 : bf16
      %247 = vector.broadcast %cst_130 : bf16 to vector<4x256xbf16>
      %c84 = arith.constant 84 : index
      %c0_131 = arith.constant 0 : index
      %248 = vector.load %arg13[%c84, %c0_131] : memref<144x256xbf16, #tpu.memory_space<vmem>>, vector<4x256xbf16>
      tpu.vector_store %arg13[%c84, %c0_131], %247 {strides = array<i32>} : memref<144x256xbf16, #tpu.memory_space<vmem>>, vector<4x256xbf16>,
      %cst_132 = arith.constant 0.000000e+00 : bf16
      %249 = vector.broadcast %cst_132 : bf16 to vector<4x256xbf16>
      %c12_133 = arith.constant 12 : index
      %c0_134 = arith.constant 0 : index
      %250 = vector.load %arg14[%c12_133, %c0_134] : memref<72x256xbf16, #tpu.memory_space<vmem>>, vector<4x256xbf16>
      tpu.vector_store %arg14[%c12_133, %c0_134], %249 {strides = array<i32>} : memref<72x256xbf16, #tpu.memory_space<vmem>>, vector<4x256xbf16>,
      %cst_135 = arith.constant 0.000000e+00 : bf16
      %251 = vector.broadcast %cst_135 : bf16 to vector<4x256xbf16>
      %c20 = arith.constant 20 : index
      %c0_136 = arith.constant 0 : index
      %252 = vector.load %arg13[%c20, %c0_136] : memref<144x256xbf16, #tpu.memory_space<vmem>>, vector<4x256xbf16>
      tpu.vector_store %arg13[%c20, %c0_136], %251 {strides = array<i32>} : memref<144x256xbf16, #tpu.memory_space<vmem>>, vector<4x256xbf16>,
      %cst_137 = arith.constant 0.000000e+00 : bf16
      %253 = vector.broadcast %cst_137 : bf16 to vector<4x256xbf16>
      %c92 = arith.constant 92 : index
      %c0_138 = arith.constant 0 : index
      %254 = vector.load %arg13[%c92, %c0_138] : memref<144x256xbf16, #tpu.memory_space<vmem>>, vector<4x256xbf16>
      tpu.vector_store %arg13[%c92, %c0_138], %253 {strides = array<i32>} : memref<144x256xbf16, #tpu.memory_space<vmem>>, vector<4x256xbf16>,
      %cst_139 = arith.constant 0.000000e+00 : bf16
      %255 = vector.broadcast %cst_139 : bf16 to vector<4x256xbf16>
      %c20_140 = arith.constant 20 : index
      %c0_141 = arith.constant 0 : index
      %256 = vector.load %arg14[%c20_140, %c0_141] : memref<72x256xbf16, #tpu.memory_space<vmem>>, vector<4x256xbf16>
      tpu.vector_store %arg14[%c20_140, %c0_141], %255 {strides = array<i32>} : memref<72x256xbf16, #tpu.memory_space<vmem>>, vector<4x256xbf16>,
      %cst_142 = arith.constant 0.000000e+00 : bf16
      %257 = vector.broadcast %cst_142 : bf16 to vector<4x256xbf16>
      %c28 = arith.constant 28 : index
      %c0_143 = arith.constant 0 : index
      %258 = vector.load %arg13[%c28, %c0_143] : memref<144x256xbf16, #tpu.memory_space<vmem>>, vector<4x256xbf16>
      tpu.vector_store %arg13[%c28, %c0_143], %257 {strides = array<i32>} : memref<144x256xbf16, #tpu.memory_space<vmem>>, vector<4x256xbf16>,
      %cst_144 = arith.constant 0.000000e+00 : bf16
      %259 = vector.broadcast %cst_144 : bf16 to vector<4x256xbf16>
      %c100 = arith.constant 100 : index
      %c0_145 = arith.constant 0 : index
      %260 = vector.load %arg13[%c100, %c0_145] : memref<144x256xbf16, #tpu.memory_space<vmem>>, vector<4x256xbf16>
      tpu.vector_store %arg13[%c100, %c0_145], %259 {strides = array<i32>} : memref<144x256xbf16, #tpu.memory_space<vmem>>, vector<4x256xbf16>,
      %cst_146 = arith.constant 0.000000e+00 : bf16
      %261 = vector.broadcast %cst_146 : bf16 to vector<4x256xbf16>
      %c28_147 = arith.constant 28 : index
      %c0_148 = arith.constant 0 : index
      %262 = vector.load %arg14[%c28_147, %c0_148] : memref<72x256xbf16, #tpu.memory_space<vmem>>, vector<4x256xbf16>
      tpu.vector_store %arg14[%c28_147, %c0_148], %261 {strides = array<i32>} : memref<72x256xbf16, #tpu.memory_space<vmem>>, vector<4x256xbf16>,
      %cst_149 = arith.constant 0.000000e+00 : bf16
      %263 = vector.broadcast %cst_149 : bf16 to vector<4x256xbf16>
      %c36 = arith.constant 36 : index
      %c0_150 = arith.constant 0 : index
      %264 = vector.load %arg13[%c36, %c0_150] : memref<144x256xbf16, #tpu.memory_space<vmem>>, vector<4x256xbf16>
      tpu.vector_store %arg13[%c36, %c0_150], %263 {strides = array<i32>} : memref<144x256xbf16, #tpu.memory_space<vmem>>, vector<4x256xbf16>,
      %cst_151 = arith.constant 0.000000e+00 : bf16
      %265 = vector.broadcast %cst_151 : bf16 to vector<4x256xbf16>
      %c108 = arith.constant 108 : index
      %c0_152 = arith.constant 0 : index
      %266 = vector.load %arg13[%c108, %c0_152] : memref<144x256xbf16, #tpu.memory_space<vmem>>, vector<4x256xbf16>
      tpu.vector_store %arg13[%c108, %c0_152], %265 {strides = array<i32>} : memref<144x256xbf16, #tpu.memory_space<vmem>>, vector<4x256xbf16>,
      %cst_153 = arith.constant 0.000000e+00 : bf16
      %267 = vector.broadcast %cst_153 : bf16 to vector<4x256xbf16>
      %c36_154 = arith.constant 36 : index
      %c0_155 = arith.constant 0 : index
      %268 = vector.load %arg14[%c36_154, %c0_155] : memref<72x256xbf16, #tpu.memory_space<vmem>>, vector<4x256xbf16>
      tpu.vector_store %arg14[%c36_154, %c0_155], %267 {strides = array<i32>} : memref<72x256xbf16, #tpu.memory_space<vmem>>, vector<4x256xbf16>,
      %cst_156 = arith.constant 0.000000e+00 : bf16
      %269 = vector.broadcast %cst_156 : bf16 to vector<4x256xbf16>
      %c44 = arith.constant 44 : index
      %c0_157 = arith.constant 0 : index
      %270 = vector.load %arg13[%c44, %c0_157] : memref<144x256xbf16, #tpu.memory_space<vmem>>, vector<4x256xbf16>
      tpu.vector_store %arg13[%c44, %c0_157], %269 {strides = array<i32>} : memref<144x256xbf16, #tpu.memory_space<vmem>>, vector<4x256xbf16>,
      %cst_158 = arith.constant 0.000000e+00 : bf16
      %271 = vector.broadcast %cst_158 : bf16 to vector<4x256xbf16>
      %c116 = arith.constant 116 : index
      %c0_159 = arith.constant 0 : index
      %272 = vector.load %arg13[%c116, %c0_159] : memref<144x256xbf16, #tpu.memory_space<vmem>>, vector<4x256xbf16>
      tpu.vector_store %arg13[%c116, %c0_159], %271 {strides = array<i32>} : memref<144x256xbf16, #tpu.memory_space<vmem>>, vector<4x256xbf16>,
      %cst_160 = arith.constant 0.000000e+00 : bf16
      %273 = vector.broadcast %cst_160 : bf16 to vector<4x256xbf16>
      %c44_161 = arith.constant 44 : index
      %c0_162 = arith.constant 0 : index
      %274 = vector.load %arg14[%c44_161, %c0_162] : memref<72x256xbf16, #tpu.memory_space<vmem>>, vector<4x256xbf16>
      tpu.vector_store %arg14[%c44_161, %c0_162], %273 {strides = array<i32>} : memref<72x256xbf16, #tpu.memory_space<vmem>>, vector<4x256xbf16>,
      %cst_163 = arith.constant 0.000000e+00 : bf16
      %275 = vector.broadcast %cst_163 : bf16 to vector<4x256xbf16>
      %c52 = arith.constant 52 : index
      %c0_164 = arith.constant 0 : index
      %276 = vector.load %arg13[%c52, %c0_164] : memref<144x256xbf16, #tpu.memory_space<vmem>>, vector<4x256xbf16>
      tpu.vector_store %arg13[%c52, %c0_164], %275 {strides = array<i32>} : memref<144x256xbf16, #tpu.memory_space<vmem>>, vector<4x256xbf16>,
      %cst_165 = arith.constant 0.000000e+00 : bf16
      %277 = vector.broadcast %cst_165 : bf16 to vector<4x256xbf16>
      %c124 = arith.constant 124 : index
      %c0_166 = arith.constant 0 : index
      %278 = vector.load %arg13[%c124, %c0_166] : memref<144x256xbf16, #tpu.memory_space<vmem>>, vector<4x256xbf16>
      tpu.vector_store %arg13[%c124, %c0_166], %277 {strides = array<i32>} : memref<144x256xbf16, #tpu.memory_space<vmem>>, vector<4x256xbf16>,
      %cst_167 = arith.constant 0.000000e+00 : bf16
      %279 = vector.broadcast %cst_167 : bf16 to vector<4x256xbf16>
      %c52_168 = arith.constant 52 : index
      %c0_169 = arith.constant 0 : index
      %280 = vector.load %arg14[%c52_168, %c0_169] : memref<72x256xbf16, #tpu.memory_space<vmem>>, vector<4x256xbf16>
      tpu.vector_store %arg14[%c52_168, %c0_169], %279 {strides = array<i32>} : memref<72x256xbf16, #tpu.memory_space<vmem>>, vector<4x256xbf16>,
      %cst_170 = arith.constant 0.000000e+00 : bf16
      %281 = vector.broadcast %cst_170 : bf16 to vector<4x256xbf16>
      %c60 = arith.constant 60 : index
      %c0_171 = arith.constant 0 : index
      %282 = vector.load %arg13[%c60, %c0_171] : memref<144x256xbf16, #tpu.memory_space<vmem>>, vector<4x256xbf16>
      tpu.vector_store %arg13[%c60, %c0_171], %281 {strides = array<i32>} : memref<144x256xbf16, #tpu.memory_space<vmem>>, vector<4x256xbf16>,
      %cst_172 = arith.constant 0.000000e+00 : bf16
      %283 = vector.broadcast %cst_172 : bf16 to vector<4x256xbf16>
      %c132 = arith.constant 132 : index
      %c0_173 = arith.constant 0 : index
      %284 = vector.load %arg13[%c132, %c0_173] : memref<144x256xbf16, #tpu.memory_space<vmem>>, vector<4x256xbf16>
      tpu.vector_store %arg13[%c132, %c0_173], %283 {strides = array<i32>} : memref<144x256xbf16, #tpu.memory_space<vmem>>, vector<4x256xbf16>,
      %cst_174 = arith.constant 0.000000e+00 : bf16
      %285 = vector.broadcast %cst_174 : bf16 to vector<4x256xbf16>
      %c60_175 = arith.constant 60 : index
      %c0_176 = arith.constant 0 : index
      %286 = vector.load %arg14[%c60_175, %c0_176] : memref<72x256xbf16, #tpu.memory_space<vmem>>, vector<4x256xbf16>
      tpu.vector_store %arg14[%c60_175, %c0_176], %285 {strides = array<i32>} : memref<72x256xbf16, #tpu.memory_space<vmem>>, vector<4x256xbf16>,
      %cst_177 = arith.constant 0.000000e+00 : bf16
      %287 = vector.broadcast %cst_177 : bf16 to vector<4x256xbf16>
      %c68 = arith.constant 68 : index
      %c0_178 = arith.constant 0 : index
      %288 = vector.load %arg13[%c68, %c0_178] : memref<144x256xbf16, #tpu.memory_space<vmem>>, vector<4x256xbf16>
      tpu.vector_store %arg13[%c68, %c0_178], %287 {strides = array<i32>} : memref<144x256xbf16, #tpu.memory_space<vmem>>, vector<4x256xbf16>,
      %cst_179 = arith.constant 0.000000e+00 : bf16
      %289 = vector.broadcast %cst_179 : bf16 to vector<4x256xbf16>
      %c140 = arith.constant 140 : index
      %c0_180 = arith.constant 0 : index
      %290 = vector.load %arg13[%c140, %c0_180] : memref<144x256xbf16, #tpu.memory_space<vmem>>, vector<4x256xbf16>
      tpu.vector_store %arg13[%c140, %c0_180], %289 {strides = array<i32>} : memref<144x256xbf16, #tpu.memory_space<vmem>>, vector<4x256xbf16>,
      %cst_181 = arith.constant 0.000000e+00 : bf16
      %291 = vector.broadcast %cst_181 : bf16 to vector<4x256xbf16>
      %c68_182 = arith.constant 68 : index
      %c0_183 = arith.constant 0 : index
      %292 = vector.load %arg14[%c68_182, %c0_183] : memref<72x256xbf16, #tpu.memory_space<vmem>>, vector<4x256xbf16>
      tpu.vector_store %arg14[%c68_182, %c0_183], %291 {strides = array<i32>} : memref<72x256xbf16, #tpu.memory_space<vmem>>, vector<4x256xbf16>,
    } else {
    }
    %c0 = arith.constant 0 : index
    %c0_1 = arith.constant 0 : index
    %c0_2 = arith.constant 0 : index
    %3 = vector.load %arg1[%c0, %c0_1, %c0_2] : memref<1x4x256xf32, #tpu.memory_space<vmem>>, vector<1x4x256xf32>
    %4 = vector.shape_cast %3 : vector<1x4x256xf32> to vector<4x256xf32>
    %c0_3 = arith.constant 0 : index
    %c0_4 = arith.constant 0 : index
    %c0_5 = arith.constant 0 : index
    %5 = vector.load %arg2[%c0_3, %c0_4, %c0_5] : memref<1x4x256xbf16, #tpu.memory_space<vmem>>, vector<1x4x256xbf16>
    %6 = vector.shape_cast %5 : vector<1x4x256xbf16> to vector<4x256xbf16>
    %7 = arith.extf %6 : vector<4x256xbf16> to vector<4x256xf32>
    %c0_6 = arith.constant 0 : index
    %c0_7 = arith.constant 0 : index
    %8 = vector.load %arg3[%c0_6, %c0_7] : memref<9x256xbf16, #tpu.memory_space<vmem>>, vector<1x256xbf16>
    %c17_i32 = arith.constant 17 : i32
    %9 = tpu.dynamic_rotate %4 by %c17_i32 dim 1 : vector<4x256xf32>, i32 -> vector<4x256xf32>
    %10 = arith.extf %8 : vector<1x256xbf16> to vector<1x256xf32>
    %11 = vector.broadcast %10 : vector<1x256xf32> to vector<4x256xf32>
    %12 = arith.mulf %9, %11 : vector<4x256xf32>
    %13 = arith.truncf %12 : vector<4x256xf32> to vector<4x256xbf16>
    %c0_8 = arith.constant 0 : index
    %c0_9 = arith.constant 0 : index
    %14 = vector.load %arg13[%c0_8, %c0_9] : memref<144x256xbf16, #tpu.memory_space<vmem>>, vector<4x256xbf16>
    tpu.vector_store %arg13[%c0_8, %c0_9], %13 {strides = array<i32>} : memref<144x256xbf16, #tpu.memory_space<vmem>>, vector<4x256xbf16>,
    %c17_i32_10 = arith.constant 17 : i32
    %15 = tpu.dynamic_rotate %7 by %c17_i32_10 dim 1 : vector<4x256xf32>, i32 -> vector<4x256xf32>
    %16 = arith.extf %8 : vector<1x256xbf16> to vector<1x256xf32>
    %17 = vector.broadcast %16 : vector<1x256xf32> to vector<4x256xf32>
    %18 = arith.mulf %15, %17 : vector<4x256xf32>
    %19 = arith.truncf %18 : vector<4x256xf32> to vector<4x256xbf16>
    %c72 = arith.constant 72 : index
    %c0_11 = arith.constant 0 : index
    %20 = vector.load %arg13[%c72, %c0_11] : memref<144x256xbf16, #tpu.memory_space<vmem>>, vector<4x256xbf16>
    tpu.vector_store %arg13[%c72, %c0_11], %19 {strides = array<i32>} : memref<144x256xbf16, #tpu.memory_space<vmem>>, vector<4x256xbf16>,
    %c1 = arith.constant 1 : index
    %c0_12 = arith.constant 0 : index
    %21 = vector.load %arg3[%c1, %c0_12] : memref<9x256xbf16, #tpu.memory_space<vmem>>, vector<1x256xbf16>
    %c16_i32 = arith.constant 16 : i32
    %22 = tpu.dynamic_rotate %4 by %c16_i32 dim 1 : vector<4x256xf32>, i32 -> vector<4x256xf32>
    %23 = arith.extf %21 : vector<1x256xbf16> to vector<1x256xf32>
    %24 = vector.broadcast %23 : vector<1x256xf32> to vector<4x256xf32>
    %25 = arith.mulf %22, %24 : vector<4x256xf32>
    %26 = arith.truncf %25 : vector<4x256xf32> to vector<4x256xbf16>
    %c8 = arith.constant 8 : index
    %c0_13 = arith.constant 0 : index
    %27 = vector.load %arg13[%c8, %c0_13] : memref<144x256xbf16, #tpu.memory_space<vmem>>, vector<4x256xbf16>
    tpu.vector_store %arg13[%c8, %c0_13], %26 {strides = array<i32>} : memref<144x256xbf16, #tpu.memory_space<vmem>>, vector<4x256xbf16>,
    %c16_i32_14 = arith.constant 16 : i32
    %28 = tpu.dynamic_rotate %7 by %c16_i32_14 dim 1 : vector<4x256xf32>, i32 -> vector<4x256xf32>
    %29 = arith.extf %21 : vector<1x256xbf16> to vector<1x256xf32>
    %30 = vector.broadcast %29 : vector<1x256xf32> to vector<4x256xf32>
    %31 = arith.mulf %28, %30 : vector<4x256xf32>
    %32 = arith.truncf %31 : vector<4x256xf32> to vector<4x256xbf16>
    %c80 = arith.constant 80 : index
    %c0_15 = arith.constant 0 : index
    %33 = vector.load %arg13[%c80, %c0_15] : memref<144x256xbf16, #tpu.memory_space<vmem>>, vector<4x256xbf16>
    tpu.vector_store %arg13[%c80, %c0_15], %32 {strides = array<i32>} : memref<144x256xbf16, #tpu.memory_space<vmem>>, vector<4x256xbf16>,
    %c2 = arith.constant 2 : index
    %c0_16 = arith.constant 0 : index
    %34 = vector.load %arg3[%c2, %c0_16] : memref<9x256xbf16, #tpu.memory_space<vmem>>, vector<1x256xbf16>
    %c15_i32 = arith.constant 15 : i32
    %35 = tpu.dynamic_rotate %4 by %c15_i32 dim 1 : vector<4x256xf32>, i32 -> vector<4x256xf32>
    %36 = arith.extf %34 : vector<1x256xbf16> to vector<1x256xf32>
    %37 = vector.broadcast %36 : vector<1x256xf32> to vector<4x256xf32>
    %38 = arith.mulf %35, %37 : vector<4x256xf32>
    %39 = arith.truncf %38 : vector<4x256xf32> to vector<4x256xbf16>
    %c16 = arith.constant 16 : index
    %c0_17 = arith.constant 0 : index
    %40 = vector.load %arg13[%c16, %c0_17] : memref<144x256xbf16, #tpu.memory_space<vmem>>, vector<4x256xbf16>
    tpu.vector_store %arg13[%c16, %c0_17], %39 {strides = array<i32>} : memref<144x256xbf16, #tpu.memory_space<vmem>>, vector<4x256xbf16>,
    %c15_i32_18 = arith.constant 15 : i32
    %41 = tpu.dynamic_rotate %7 by %c15_i32_18 dim 1 : vector<4x256xf32>, i32 -> vector<4x256xf32>
    %42 = arith.extf %34 : vector<1x256xbf16> to vector<1x256xf32>
    %43 = vector.broadcast %42 : vector<1x256xf32> to vector<4x256xf32>
    %44 = arith.mulf %41, %43 : vector<4x256xf32>
    %45 = arith.truncf %44 : vector<4x256xf32> to vector<4x256xbf16>
    %c88 = arith.constant 88 : index
    %c0_19 = arith.constant 0 : index
    %46 = vector.load %arg13[%c88, %c0_19] : memref<144x256xbf16, #tpu.memory_space<vmem>>, vector<4x256xbf16>
    tpu.vector_store %arg13[%c88, %c0_19], %45 {strides = array<i32>} : memref<144x256xbf16, #tpu.memory_space<vmem>>, vector<4x256xbf16>,
    %c3 = arith.constant 3 : index
    %c0_20 = arith.constant 0 : index
    %47 = vector.load %arg3[%c3, %c0_20] : memref<9x256xbf16, #tpu.memory_space<vmem>>, vector<1x256xbf16>
    %c1_i32 = arith.constant 1 : i32
    %48 = tpu.dynamic_rotate %4 by %c1_i32 dim 1 : vector<4x256xf32>, i32 -> vector<4x256xf32>
    %49 = arith.extf %47 : vector<1x256xbf16> to vector<1x256xf32>
    %50 = vector.broadcast %49 : vector<1x256xf32> to vector<4x256xf32>
    %51 = arith.mulf %48, %50 : vector<4x256xf32>
    %52 = arith.truncf %51 : vector<4x256xf32> to vector<4x256xbf16>
    %c24 = arith.constant 24 : index
    %c0_21 = arith.constant 0 : index
    %53 = vector.load %arg13[%c24, %c0_21] : memref<144x256xbf16, #tpu.memory_space<vmem>>, vector<4x256xbf16>
    tpu.vector_store %arg13[%c24, %c0_21], %52 {strides = array<i32>} : memref<144x256xbf16, #tpu.memory_space<vmem>>, vector<4x256xbf16>,
    %c1_i32_22 = arith.constant 1 : i32
    %54 = tpu.dynamic_rotate %7 by %c1_i32_22 dim 1 : vector<4x256xf32>, i32 -> vector<4x256xf32>
    %55 = arith.extf %47 : vector<1x256xbf16> to vector<1x256xf32>
    %56 = vector.broadcast %55 : vector<1x256xf32> to vector<4x256xf32>
    %57 = arith.mulf %54, %56 : vector<4x256xf32>
    %58 = arith.truncf %57 : vector<4x256xf32> to vector<4x256xbf16>
    %c96 = arith.constant 96 : index
    %c0_23 = arith.constant 0 : index
    %59 = vector.load %arg13[%c96, %c0_23] : memref<144x256xbf16, #tpu.memory_space<vmem>>, vector<4x256xbf16>
    tpu.vector_store %arg13[%c96, %c0_23], %58 {strides = array<i32>} : memref<144x256xbf16, #tpu.memory_space<vmem>>, vector<4x256xbf16>,
    %60 = arith.truncf %4 : vector<4x256xf32> to vector<4x256xbf16>
    %c32 = arith.constant 32 : index
    %c0_24 = arith.constant 0 : index
    %61 = vector.load %arg13[%c32, %c0_24] : memref<144x256xbf16, #tpu.memory_space<vmem>>, vector<4x256xbf16>
    tpu.vector_store %arg13[%c32, %c0_24], %60 {strides = array<i32>} : memref<144x256xbf16, #tpu.memory_space<vmem>>, vector<4x256xbf16>,
    %62 = arith.truncf %7 : vector<4x256xf32> to vector<4x256xbf16>
    %c104 = arith.constant 104 : index
    %c0_25 = arith.constant 0 : index
    %63 = vector.load %arg13[%c104, %c0_25] : memref<144x256xbf16, #tpu.memory_space<vmem>>, vector<4x256xbf16>
    tpu.vector_store %arg13[%c104, %c0_25], %62 {strides = array<i32>} : memref<144x256xbf16, #tpu.memory_space<vmem>>, vector<4x256xbf16>,
    %c5 = arith.constant 5 : index
    %c0_26 = arith.constant 0 : index
    %64 = vector.load %arg3[%c5, %c0_26] : memref<9x256xbf16, #tpu.memory_space<vmem>>, vector<1x256xbf16>
    %c255_i32 = arith.constant 255 : i32
    %65 = tpu.dynamic_rotate %4 by %c255_i32 dim 1 : vector<4x256xf32>, i32 -> vector<4x256xf32>
    %66 = arith.extf %64 : vector<1x256xbf16> to vector<1x256xf32>
    %67 = vector.broadcast %66 : vector<1x256xf32> to vector<4x256xf32>
    %68 = arith.mulf %65, %67 : vector<4x256xf32>
    %69 = arith.truncf %68 : vector<4x256xf32> to vector<4x256xbf16>
    %c40 = arith.constant 40 : index
    %c0_27 = arith.constant 0 : index
    %70 = vector.load %arg13[%c40, %c0_27] : memref<144x256xbf16, #tpu.memory_space<vmem>>, vector<4x256xbf16>
    tpu.vector_store %arg13[%c40, %c0_27], %69 {strides = array<i32>} : memref<144x256xbf16, #tpu.memory_space<vmem>>, vector<4x256xbf16>,
    %c255_i32_28 = arith.constant 255 : i32
    %71 = tpu.dynamic_rotate %7 by %c255_i32_28 dim 1 : vector<4x256xf32>, i32 -> vector<4x256xf32>
    %72 = arith.extf %64 : vector<1x256xbf16> to vector<1x256xf32>
    %73 = vector.broadcast %72 : vector<1x256xf32> to vector<4x256xf32>
    %74 = arith.mulf %71, %73 : vector<4x256xf32>
    %75 = arith.truncf %74 : vector<4x256xf32> to vector<4x256xbf16>
    %c112 = arith.constant 112 : index
    %c0_29 = arith.constant 0 : index
    %76 = vector.load %arg13[%c112, %c0_29] : memref<144x256xbf16, #tpu.memory_space<vmem>>, vector<4x256xbf16>
    tpu.vector_store %arg13[%c112, %c0_29], %75 {strides = array<i32>} : memref<144x256xbf16, #tpu.memory_space<vmem>>, vector<4x256xbf16>,
    %c6 = arith.constant 6 : index
    %c0_30 = arith.constant 0 : index
    %77 = vector.load %arg3[%c6, %c0_30] : memref<9x256xbf16, #tpu.memory_space<vmem>>, vector<1x256xbf16>
    %c241_i32 = arith.constant 241 : i32
    %78 = tpu.dynamic_rotate %4 by %c241_i32 dim 1 : vector<4x256xf32>, i32 -> vector<4x256xf32>
    %79 = arith.extf %77 : vector<1x256xbf16> to vector<1x256xf32>
    %80 = vector.broadcast %79 : vector<1x256xf32> to vector<4x256xf32>
    %81 = arith.mulf %78, %80 : vector<4x256xf32>
    %82 = arith.truncf %81 : vector<4x256xf32> to vector<4x256xbf16>
    %c48 = arith.constant 48 : index
    %c0_31 = arith.constant 0 : index
    %83 = vector.load %arg13[%c48, %c0_31] : memref<144x256xbf16, #tpu.memory_space<vmem>>, vector<4x256xbf16>
    tpu.vector_store %arg13[%c48, %c0_31], %82 {strides = array<i32>} : memref<144x256xbf16, #tpu.memory_space<vmem>>, vector<4x256xbf16>,
    %c241_i32_32 = arith.constant 241 : i32
    %84 = tpu.dynamic_rotate %7 by %c241_i32_32 dim 1 : vector<4x256xf32>, i32 -> vector<4x256xf32>
    %85 = arith.extf %77 : vector<1x256xbf16> to vector<1x256xf32>
    %86 = vector.broadcast %85 : vector<1x256xf32> to vector<4x256xf32>
    %87 = arith.mulf %84, %86 : vector<4x256xf32>
    %88 = arith.truncf %87 : vector<4x256xf32> to vector<4x256xbf16>
    %c120 = arith.constant 120 : index
    %c0_33 = arith.constant 0 : index
    %89 = vector.load %arg13[%c120, %c0_33] : memref<144x256xbf16, #tpu.memory_space<vmem>>, vector<4x256xbf16>
    tpu.vector_store %arg13[%c120, %c0_33], %88 {strides = array<i32>} : memref<144x256xbf16, #tpu.memory_space<vmem>>, vector<4x256xbf16>,
    %c7 = arith.constant 7 : index
    %c0_34 = arith.constant 0 : index
    %90 = vector.load %arg3[%c7, %c0_34] : memref<9x256xbf16, #tpu.memory_space<vmem>>, vector<1x256xbf16>
    %c240_i32 = arith.constant 240 : i32
    %91 = tpu.dynamic_rotate %4 by %c240_i32 dim 1 : vector<4x256xf32>, i32 -> vector<4x256xf32>
    %92 = arith.extf %90 : vector<1x256xbf16> to vector<1x256xf32>
    %93 = vector.broadcast %92 : vector<1x256xf32> to vector<4x256xf32>
    %94 = arith.mulf %91, %93 : vector<4x256xf32>
    %95 = arith.truncf %94 : vector<4x256xf32> to vector<4x256xbf16>
    %c56 = arith.constant 56 : index
    %c0_35 = arith.constant 0 : index
    %96 = vector.load %arg13[%c56, %c0_35] : memref<144x256xbf16, #tpu.memory_space<vmem>>, vector<4x256xbf16>
    tpu.vector_store %arg13[%c56, %c0_35], %95 {strides = array<i32>} : memref<144x256xbf16, #tpu.memory_space<vmem>>, vector<4x256xbf16>,
    %c240_i32_36 = arith.constant 240 : i32
    %97 = tpu.dynamic_rotate %7 by %c240_i32_36 dim 1 : vector<4x256xf32>, i32 -> vector<4x256xf32>
    %98 = arith.extf %90 : vector<1x256xbf16> to vector<1x256xf32>
    %99 = vector.broadcast %98 : vector<1x256xf32> to vector<4x256xf32>
    %100 = arith.mulf %97, %99 : vector<4x256xf32>
    %101 = arith.truncf %100 : vector<4x256xf32> to vector<4x256xbf16>
    %c128 = arith.constant 128 : index
    %c0_37 = arith.constant 0 : index
    %102 = vector.load %arg13[%c128, %c0_37] : memref<144x256xbf16, #tpu.memory_space<vmem>>, vector<4x256xbf16>
    tpu.vector_store %arg13[%c128, %c0_37], %101 {strides = array<i32>} : memref<144x256xbf16, #tpu.memory_space<vmem>>, vector<4x256xbf16>,
    %c8_38 = arith.constant 8 : index
    %c0_39 = arith.constant 0 : index
    %103 = vector.load %arg3[%c8_38, %c0_39] : memref<9x256xbf16, #tpu.memory_space<vmem>>, vector<1x256xbf16>
    %c239_i32 = arith.constant 239 : i32
    %104 = tpu.dynamic_rotate %4 by %c239_i32 dim 1 : vector<4x256xf32>, i32 -> vector<4x256xf32>
    %105 = arith.extf %103 : vector<1x256xbf16> to vector<1x256xf32>
    %106 = vector.broadcast %105 : vector<1x256xf32> to vector<4x256xf32>
    %107 = arith.mulf %104, %106 : vector<4x256xf32>
    %108 = arith.truncf %107 : vector<4x256xf32> to vector<4x256xbf16>
    %c64 = arith.constant 64 : index
    %c0_40 = arith.constant 0 : index
    %109 = vector.load %arg13[%c64, %c0_40] : memref<144x256xbf16, #tpu.memory_space<vmem>>, vector<4x256xbf16>
    tpu.vector_store %arg13[%c64, %c0_40], %108 {strides = array<i32>} : memref<144x256xbf16, #tpu.memory_space<vmem>>, vector<4x256xbf16>,
    %c239_i32_41 = arith.constant 239 : i32
    %110 = tpu.dynamic_rotate %7 by %c239_i32_41 dim 1 : vector<4x256xf32>, i32 -> vector<4x256xf32>
    %111 = arith.extf %103 : vector<1x256xbf16> to vector<1x256xf32>
    %112 = vector.broadcast %111 : vector<1x256xf32> to vector<4x256xf32>
    %113 = arith.mulf %110, %112 : vector<4x256xf32>
    %114 = arith.truncf %113 : vector<4x256xf32> to vector<4x256xbf16>
    %c136 = arith.constant 136 : index
    %c0_42 = arith.constant 0 : index
    %115 = vector.load %arg13[%c136, %c0_42] : memref<144x256xbf16, #tpu.memory_space<vmem>>, vector<4x256xbf16>
    tpu.vector_store %arg13[%c136, %c0_42], %114 {strides = array<i32>} : memref<144x256xbf16, #tpu.memory_space<vmem>>, vector<4x256xbf16>,
    %c0_43 = arith.constant 0 : index
    %c0_44 = arith.constant 0 : index
    %116 = vector.load %arg4[%c0_43, %c0_44] : memref<4x144xbf16, #tpu.memory_space<vmem>>, vector<4x144xbf16>
    %c0_45 = arith.constant 0 : index
    %c0_46 = arith.constant 0 : index
    %117 = vector.load %arg13[%c0_45, %c0_46] : memref<144x256xbf16, #tpu.memory_space<vmem>>, vector<144x256xbf16>
    %cst = arith.constant dense<0.000000e+00> : vector<4x256xf32>
    %118 = tpu.matmul %116, %117, %cst {dimension_numbers = #tpu.dot_dimension_numbers<[1], [0], [0], [1], [0, 0, 1, 1], [], []>} : vector<4x144xbf16>, vector<144x256xbf16>, vector<4x256xf32> -> vector<4x256xf32>
    %c0_47 = arith.constant 0 : index
    %c0_48 = arith.constant 0 : index
    %119 = vector.load %arg5[%c0_47, %c0_48] : memref<4x1xf32, #tpu.memory_space<vmem>>, vector<4x1xf32>
    %120 = vector.broadcast %119 : vector<4x1xf32> to vector<4x256xf32>
    %121 = arith.addf %118, %120 : vector<4x256xf32>
    %122 = vector.shape_cast %121 : vector<4x256xf32> to vector<1x4x256xf32>
    %cst_49 = arith.constant dense<0.000000e+00> : vector<1xf32>
    %123 = vector.multi_reduction <add>, %122, %cst_49 [1, 2] : vector<1x4x256xf32> to vector<1xf32>
    %124 = vector.shape_cast %123 : vector<1xf32> to vector<1x1x1xf32>
    %125 = vector.extract %124[0, 0, 0] : f32 from vector<1x1x1xf32>
    %cst_50 = arith.constant 9.765625E-4 : f32
    %126 = arith.mulf %125, %cst_50 : f32
    %127 = vector.broadcast %126 : f32 to vector<4x256xf32>
    %128 = arith.subf %121, %127 : vector<4x256xf32>
    %129 = arith.mulf %128, %128 : vector<4x256xf32>
    %130 = vector.shape_cast %129 : vector<4x256xf32> to vector<1x4x256xf32>
    %cst_51 = arith.constant dense<0.000000e+00> : vector<1xf32>
    %131 = vector.multi_reduction <add>, %130, %cst_51 [1, 2] : vector<1x4x256xf32> to vector<1xf32>
    %132 = vector.shape_cast %131 : vector<1xf32> to vector<1x1x1xf32>
    %133 = vector.extract %132[0, 0, 0] : f32 from vector<1x1x1xf32>
    %cst_52 = arith.constant 9.765625E-4 : f32
    %134 = arith.mulf %133, %cst_52 : f32
    %cst_53 = arith.constant 9.99999974E-6 : f32
    %135 = arith.addf %134, %cst_53 : f32
    %136 = math.rsqrt %135 : f32
    %137 = vector.broadcast %136 : f32 to vector<4x256xf32>
    %138 = arith.mulf %128, %137 : vector<4x256xf32>
    %c0_54 = arith.constant 0 : index
    %c0_55 = arith.constant 0 : index
    %139 = vector.load %arg6[%c0_54, %c0_55] : memref<4x256xbf16, #tpu.memory_space<vmem>>, vector<4x256xbf16>
    %140 = arith.extf %139 : vector<4x256xbf16> to vector<4x256xf32>
    %141 = arith.mulf %138, %140 : vector<4x256xf32>
    %c0_56 = arith.constant 0 : index
    %c0_57 = arith.constant 0 : index
    %142 = vector.load %arg7[%c0_56, %c0_57] : memref<4x256xbf16, #tpu.memory_space<vmem>>, vector<4x256xbf16>
    %143 = arith.extf %142 : vector<4x256xbf16> to vector<4x256xf32>
    %144 = arith.addf %141, %143 : vector<4x256xf32>
    %cst_58 = arith.constant 0.000000e+00 : f32
    %145 = vector.broadcast %cst_58 : f32 to vector<4x256xf32>
    %146 = arith.maximumf %144, %145 : vector<4x256xf32>
    %c0_59 = arith.constant 0 : index
    %c0_60 = arith.constant 0 : index
    %147 = vector.load %arg3[%c0_59, %c0_60] : memref<9x256xbf16, #tpu.memory_space<vmem>>, vector<1x256xbf16>
    %c17_i32_61 = arith.constant 17 : i32
    %148 = tpu.dynamic_rotate %146 by %c17_i32_61 dim 1 : vector<4x256xf32>, i32 -> vector<4x256xf32>
    %149 = arith.extf %147 : vector<1x256xbf16> to vector<1x256xf32>
    %150 = vector.broadcast %149 : vector<1x256xf32> to vector<4x256xf32>
    %151 = arith.mulf %148, %150 : vector<4x256xf32>
    %152 = arith.truncf %151 : vector<4x256xf32> to vector<4x256xbf16>
    %c0_62 = arith.constant 0 : index
    %c0_63 = arith.constant 0 : index
    %153 = vector.load %arg14[%c0_62, %c0_63] : memref<72x256xbf16, #tpu.memory_space<vmem>>, vector<4x256xbf16>
    tpu.vector_store %arg14[%c0_62, %c0_63], %152 {strides = array<i32>} : memref<72x256xbf16, #tpu.memory_space<vmem>>, vector<4x256xbf16>,
    %c1_64 = arith.constant 1 : index
    %c0_65 = arith.constant 0 : index
    %154 = vector.load %arg3[%c1_64, %c0_65] : memref<9x256xbf16, #tpu.memory_space<vmem>>, vector<1x256xbf16>
    %c16_i32_66 = arith.constant 16 : i32
    %155 = tpu.dynamic_rotate %146 by %c16_i32_66 dim 1 : vector<4x256xf32>, i32 -> vector<4x256xf32>
    %156 = arith.extf %154 : vector<1x256xbf16> to vector<1x256xf32>
    %157 = vector.broadcast %156 : vector<1x256xf32> to vector<4x256xf32>
    %158 = arith.mulf %155, %157 : vector<4x256xf32>
    %159 = arith.truncf %158 : vector<4x256xf32> to vector<4x256xbf16>
    %c8_67 = arith.constant 8 : index
    %c0_68 = arith.constant 0 : index
    %160 = vector.load %arg14[%c8_67, %c0_68] : memref<72x256xbf16, #tpu.memory_space<vmem>>, vector<4x256xbf16>
    tpu.vector_store %arg14[%c8_67, %c0_68], %159 {strides = array<i32>} : memref<72x256xbf16, #tpu.memory_space<vmem>>, vector<4x256xbf16>,
    %c2_69 = arith.constant 2 : index
    %c0_70 = arith.constant 0 : index
    %161 = vector.load %arg3[%c2_69, %c0_70] : memref<9x256xbf16, #tpu.memory_space<vmem>>, vector<1x256xbf16>
    %c15_i32_71 = arith.constant 15 : i32
    %162 = tpu.dynamic_rotate %146 by %c15_i32_71 dim 1 : vector<4x256xf32>, i32 -> vector<4x256xf32>
    %163 = arith.extf %161 : vector<1x256xbf16> to vector<1x256xf32>
    %164 = vector.broadcast %163 : vector<1x256xf32> to vector<4x256xf32>
    %165 = arith.mulf %162, %164 : vector<4x256xf32>
    %166 = arith.truncf %165 : vector<4x256xf32> to vector<4x256xbf16>
    %c16_72 = arith.constant 16 : index
    %c0_73 = arith.constant 0 : index
    %167 = vector.load %arg14[%c16_72, %c0_73] : memref<72x256xbf16, #tpu.memory_space<vmem>>, vector<4x256xbf16>
    tpu.vector_store %arg14[%c16_72, %c0_73], %166 {strides = array<i32>} : memref<72x256xbf16, #tpu.memory_space<vmem>>, vector<4x256xbf16>,
    %c3_74 = arith.constant 3 : index
    %c0_75 = arith.constant 0 : index
    %168 = vector.load %arg3[%c3_74, %c0_75] : memref<9x256xbf16, #tpu.memory_space<vmem>>, vector<1x256xbf16>
    %c1_i32_76 = arith.constant 1 : i32
    %169 = tpu.dynamic_rotate %146 by %c1_i32_76 dim 1 : vector<4x256xf32>, i32 -> vector<4x256xf32>
    %170 = arith.extf %168 : vector<1x256xbf16> to vector<1x256xf32>
    %171 = vector.broadcast %170 : vector<1x256xf32> to vector<4x256xf32>
    %172 = arith.mulf %169, %171 : vector<4x256xf32>
    %173 = arith.truncf %172 : vector<4x256xf32> to vector<4x256xbf16>
    %c24_77 = arith.constant 24 : index
    %c0_78 = arith.constant 0 : index
    %174 = vector.load %arg14[%c24_77, %c0_78] : memref<72x256xbf16, #tpu.memory_space<vmem>>, vector<4x256xbf16>
    tpu.vector_store %arg14[%c24_77, %c0_78], %173 {strides = array<i32>} : memref<72x256xbf16, #tpu.memory_space<vmem>>, vector<4x256xbf16>,
    %175 = arith.truncf %146 : vector<4x256xf32> to vector<4x256xbf16>
    %c32_79 = arith.constant 32 : index
    %c0_80 = arith.constant 0 : index
    %176 = vector.load %arg14[%c32_79, %c0_80] : memref<72x256xbf16, #tpu.memory_space<vmem>>, vector<4x256xbf16>
    tpu.vector_store %arg14[%c32_79, %c0_80], %175 {strides = array<i32>} : memref<72x256xbf16, #tpu.memory_space<vmem>>, vector<4x256xbf16>,
    %c5_81 = arith.constant 5 : index
    %c0_82 = arith.constant 0 : index
    %177 = vector.load %arg3[%c5_81, %c0_82] : memref<9x256xbf16, #tpu.memory_space<vmem>>, vector<1x256xbf16>
    %c255_i32_83 = arith.constant 255 : i32
    %178 = tpu.dynamic_rotate %146 by %c255_i32_83 dim 1 : vector<4x256xf32>, i32 -> vector<4x256xf32>
    %179 = arith.extf %177 : vector<1x256xbf16> to vector<1x256xf32>
    %180 = vector.broadcast %179 : vector<1x256xf32> to vector<4x256xf32>
    %181 = arith.mulf %178, %180 : vector<4x256xf32>
    %182 = arith.truncf %181 : vector<4x256xf32> to vector<4x256xbf16>
    %c40_84 = arith.constant 40 : index
    %c0_85 = arith.constant 0 : index
    %183 = vector.load %arg14[%c40_84, %c0_85] : memref<72x256xbf16, #tpu.memory_space<vmem>>, vector<4x256xbf16>
    tpu.vector_store %arg14[%c40_84, %c0_85], %182 {strides = array<i32>} : memref<72x256xbf16, #tpu.memory_space<vmem>>, vector<4x256xbf16>,
    %c6_86 = arith.constant 6 : index
    %c0_87 = arith.constant 0 : index
    %184 = vector.load %arg3[%c6_86, %c0_87] : memref<9x256xbf16, #tpu.memory_space<vmem>>, vector<1x256xbf16>
    %c241_i32_88 = arith.constant 241 : i32
    %185 = tpu.dynamic_rotate %146 by %c241_i32_88 dim 1 : vector<4x256xf32>, i32 -> vector<4x256xf32>
    %186 = arith.extf %184 : vector<1x256xbf16> to vector<1x256xf32>
    %187 = vector.broadcast %186 : vector<1x256xf32> to vector<4x256xf32>
    %188 = arith.mulf %185, %187 : vector<4x256xf32>
    %189 = arith.truncf %188 : vector<4x256xf32> to vector<4x256xbf16>
    %c48_89 = arith.constant 48 : index
    %c0_90 = arith.constant 0 : index
    %190 = vector.load %arg14[%c48_89, %c0_90] : memref<72x256xbf16, #tpu.memory_space<vmem>>, vector<4x256xbf16>
    tpu.vector_store %arg14[%c48_89, %c0_90], %189 {strides = array<i32>} : memref<72x256xbf16, #tpu.memory_space<vmem>>, vector<4x256xbf16>,
    %c7_91 = arith.constant 7 : index
    %c0_92 = arith.constant 0 : index
    %191 = vector.load %arg3[%c7_91, %c0_92] : memref<9x256xbf16, #tpu.memory_space<vmem>>, vector<1x256xbf16>
    %c240_i32_93 = arith.constant 240 : i32
    %192 = tpu.dynamic_rotate %146 by %c240_i32_93 dim 1 : vector<4x256xf32>, i32 -> vector<4x256xf32>
    %193 = arith.extf %191 : vector<1x256xbf16> to vector<1x256xf32>
    %194 = vector.broadcast %193 : vector<1x256xf32> to vector<4x256xf32>
    %195 = arith.mulf %192, %194 : vector<4x256xf32>
    %196 = arith.truncf %195 : vector<4x256xf32> to vector<4x256xbf16>
    %c56_94 = arith.constant 56 : index
    %c0_95 = arith.constant 0 : index
    %197 = vector.load %arg14[%c56_94, %c0_95] : memref<72x256xbf16, #tpu.memory_space<vmem>>, vector<4x256xbf16>
    tpu.vector_store %arg14[%c56_94, %c0_95], %196 {strides = array<i32>} : memref<72x256xbf16, #tpu.memory_space<vmem>>, vector<4x256xbf16>,
    %c8_96 = arith.constant 8 : index
    %c0_97 = arith.constant 0 : index
    %198 = vector.load %arg3[%c8_96, %c0_97] : memref<9x256xbf16, #tpu.memory_space<vmem>>, vector<1x256xbf16>
    %c239_i32_98 = arith.constant 239 : i32
    %199 = tpu.dynamic_rotate %146 by %c239_i32_98 dim 1 : vector<4x256xf32>, i32 -> vector<4x256xf32>
    %200 = arith.extf %198 : vector<1x256xbf16> to vector<1x256xf32>
    %201 = vector.broadcast %200 : vector<1x256xf32> to vector<4x256xf32>
    %202 = arith.mulf %199, %201 : vector<4x256xf32>
    %203 = arith.truncf %202 : vector<4x256xf32> to vector<4x256xbf16>
    %c64_99 = arith.constant 64 : index
    %c0_100 = arith.constant 0 : index
    %204 = vector.load %arg14[%c64_99, %c0_100] : memref<72x256xbf16, #tpu.memory_space<vmem>>, vector<4x256xbf16>
    tpu.vector_store %arg14[%c64_99, %c0_100], %203 {strides = array<i32>} : memref<72x256xbf16, #tpu.memory_space<vmem>>, vector<4x256xbf16>,
    %c0_101 = arith.constant 0 : index
    %c0_102 = arith.constant 0 : index
    %205 = vector.load %arg8[%c0_101, %c0_102] : memref<4x72xbf16, #tpu.memory_space<vmem>>, vector<4x72xbf16>
    %c0_103 = arith.constant 0 : index
    %c0_104 = arith.constant 0 : index
    %206 = vector.load %arg14[%c0_103, %c0_104] : memref<72x256xbf16, #tpu.memory_space<vmem>>, vector<72x256xbf16>
    %cst_105 = arith.constant dense<0.000000e+00> : vector<4x256xf32>
    %207 = tpu.matmul %205, %206, %cst_105 {dimension_numbers = #tpu.dot_dimension_numbers<[1], [0], [0], [1], [0, 0, 1, 1], [], []>} : vector<4x72xbf16>, vector<72x256xbf16>, vector<4x256xf32> -> vector<4x256xf32>
    %c0_106 = arith.constant 0 : index
    %c0_107 = arith.constant 0 : index
    %208 = vector.load %arg9[%c0_106, %c0_107] : memref<4x1xf32, #tpu.memory_space<vmem>>, vector<4x1xf32>
    %209 = vector.broadcast %208 : vector<4x1xf32> to vector<4x256xf32>
    %210 = arith.addf %207, %209 : vector<4x256xf32>
    %211 = vector.shape_cast %210 : vector<4x256xf32> to vector<1x4x256xf32>
    %cst_108 = arith.constant dense<0.000000e+00> : vector<1xf32>
    %212 = vector.multi_reduction <add>, %211, %cst_108 [1, 2] : vector<1x4x256xf32> to vector<1xf32>
    %213 = vector.shape_cast %212 : vector<1xf32> to vector<1x1x1xf32>
    %214 = vector.extract %213[0, 0, 0] : f32 from vector<1x1x1xf32>
    %cst_109 = arith.constant 9.765625E-4 : f32
    %215 = arith.mulf %214, %cst_109 : f32
    %216 = vector.broadcast %215 : f32 to vector<4x256xf32>
    %217 = arith.subf %210, %216 : vector<4x256xf32>
    %218 = arith.mulf %217, %217 : vector<4x256xf32>
    %219 = vector.shape_cast %218 : vector<4x256xf32> to vector<1x4x256xf32>
    %cst_110 = arith.constant dense<0.000000e+00> : vector<1xf32>
    %220 = vector.multi_reduction <add>, %219, %cst_110 [1, 2] : vector<1x4x256xf32> to vector<1xf32>
    %221 = vector.shape_cast %220 : vector<1xf32> to vector<1x1x1xf32>
    %222 = vector.extract %221[0, 0, 0] : f32 from vector<1x1x1xf32>
    %cst_111 = arith.constant 9.765625E-4 : f32
    %223 = arith.mulf %222, %cst_111 : f32
    %cst_112 = arith.constant 9.99999974E-6 : f32
    %224 = arith.addf %223, %cst_112 : f32
    %225 = math.rsqrt %224 : f32
    %226 = vector.broadcast %225 : f32 to vector<4x256xf32>
    %227 = arith.mulf %217, %226 : vector<4x256xf32>
    %c0_113 = arith.constant 0 : index
    %c0_114 = arith.constant 0 : index
    %228 = vector.load %arg10[%c0_113, %c0_114] : memref<4x256xbf16, #tpu.memory_space<vmem>>, vector<4x256xbf16>
    %229 = arith.extf %228 : vector<4x256xbf16> to vector<4x256xf32>
    %230 = arith.mulf %227, %229 : vector<4x256xf32>
    %c0_115 = arith.constant 0 : index
    %c0_116 = arith.constant 0 : index
    %231 = vector.load %arg11[%c0_115, %c0_116] : memref<4x256xbf16, #tpu.memory_space<vmem>>, vector<4x256xbf16>
    %232 = arith.extf %231 : vector<4x256xbf16> to vector<4x256xf32>
    %233 = arith.addf %230, %232 : vector<4x256xf32>
    %cst_117 = arith.constant 0.000000e+00 : f32
    %234 = vector.broadcast %cst_117 : f32 to vector<4x256xf32>
    %235 = arith.maximumf %233, %234 : vector<4x256xf32>
    %c0_118 = arith.constant 0 : index
    %c0_119 = arith.constant 0 : index
    %c0_120 = arith.constant 0 : index
    %236 = vector.load %arg12[%c0_118, %c0_119, %c0_120] : memref<1x4x256xf32, #tpu.memory_space<vmem>>, vector<1x4x256xf32>
    %237 = vector.shape_cast %236 : vector<1x4x256xf32> to vector<4x256xf32>
    %238 = vector.shape_cast %235 : vector<4x256xf32> to vector<1x4x256xf32>
    tpu.vector_store %arg12[%c0_118, %c0_119, %c0_120], %238 {strides = array<i32>} : memref<1x4x256xf32, #tpu.memory_space<vmem>>, vector<1x4x256xf32>,
    return
  }
  func.func @transform_0(%arg0: i32) -> (i32, i32, i32) {
    %c0_i32 = arith.constant 0 : i32
    %c0_i32_0 = arith.constant 0 : i32
    %c0_i32_1 = arith.constant 0 : i32
    return %arg0, %c0_i32, %c0_i32_0 : i32, i32, i32
  }
  func.func @transform_1(%arg0: i32) -> (i32, i32, i32) {
    %c0_i32 = arith.constant 0 : i32
    %c0_i32_0 = arith.constant 0 : i32
    %c0_i32_1 = arith.constant 0 : i32
    return %arg0, %c0_i32, %c0_i32_0 : i32, i32, i32
  }
  func.func @transform_2(%arg0: i32) -> (i32, i32) {
    %c0_i32 = arith.constant 0 : i32
    %c0_i32_0 = arith.constant 0 : i32
    %c0_i32_1 = arith.constant 0 : i32
    return %c0_i32, %c0_i32_0 : i32, i32
  }
  func.func @transform_3(%arg0: i32) -> (i32, i32) {
    %c0_i32 = arith.constant 0 : i32
    %c0_i32_0 = arith.constant 0 : i32
    %c0_i32_1 = arith.constant 0 : i32
    return %c0_i32, %c0_i32_0 : i32, i32
  }
  func.func @transform_4(%arg0: i32) -> (i32, i32) {
    %c0_i32 = arith.constant 0 : i32
    %c0_i32_0 = arith.constant 0 : i32
    %c0_i32_1 = arith.constant 0 : i32
    return %c0_i32, %c0_i32_0 : i32, i32
  }
  func.func @transform_5(%arg0: i32) -> (i32, i32) {
    %c0_i32 = arith.constant 0 : i32
    %c0_i32_0 = arith.constant 0 : i32
    %c0_i32_1 = arith.constant 0 : i32
    return %c0_i32, %c0_i32_0 : i32, i32
  }
  func.func @transform_6(%arg0: i32) -> (i32, i32) {
    %c0_i32 = arith.constant 0 : i32
    %c0_i32_0 = arith.constant 0 : i32
    %c0_i32_1 = arith.constant 0 : i32
    return %c0_i32, %c0_i32_0 : i32, i32
  }
  func.func @transform_7(%arg0: i32) -> (i32, i32) {
    %c0_i32 = arith.constant 0 : i32
    %c0_i32_0 = arith.constant 0 : i32
    %c0_i32_1 = arith.constant 0 : i32
    return %c0_i32, %c0_i32_0 : i32, i32
  }
  func.func @transform_8(%arg0: i32) -> (i32, i32) {
    %c0_i32 = arith.constant 0 : i32
    %c0_i32_0 = arith.constant 0 : i32
    %c0_i32_1 = arith.constant 0 : i32
    return %c0_i32, %c0_i32_0 : i32, i32
  }
  func.func @transform_9(%arg0: i32) -> (i32, i32) {
    %c0_i32 = arith.constant 0 : i32
    %c0_i32_0 = arith.constant 0 : i32
    %c0_i32_1 = arith.constant 0 : i32
    return %c0_i32, %c0_i32_0 : i32, i32
  }
  func.func @transform_10(%arg0: i32) -> (i32, i32) {
    %c0_i32 = arith.constant 0 : i32
    %c0_i32_0 = arith.constant 0 : i32
    %c0_i32_1 = arith.constant 0 : i32
    return %c0_i32, %c0_i32_0 : i32, i32
  }
  func.func @transform_11(%arg0: i32) -> (i32, i32, i32) {
    %c0_i32 = arith.constant 0 : i32
    %c0_i32_0 = arith.constant 0 : i32
    %c0_i32_1 = arith.constant 0 : i32
    return %arg0, %c0_i32, %c0_i32_0 : i32, i32, i32
  }
}

</mosaic_0001>

<llo_original>
// kernel: tile.8
$region0: #{tile.8}
  #allocation0 [shape = 's32[1]{0}', space=sflag, size = 0x4, scoped, tag = 'scoped memory for tile.8']
  %s0 = inlined_call_operand.vmem [shape: f32[4], index: 0, kind: input, shape index: {}]
  %s1 = inlined_call_operand.vmem [shape: f32[4,4], index: 1, kind: output, shape index: {}]
  // Predicated region
  $region2: #{tile.8} parent=0 // pred_check
    _
  $region3: #{tile.8} parent=0 // pred_check_branch
    %3 = sbr.rel (0) target = $region5
  $region4: #{tile.8} parent=0 // pred_region
    _
  $region5: #{tile.8} parent=0 // pred_fallthru
    _
  %v4 = vld [vmem:[%s0] ss:$0 sm:$0xff]
  %5 = vst [vmem:[%s1] sm:$0xf] %v4

// kernel: tile.0
$region0: #{tile.0}
  %s0 = inlined_call_operand.vmem [shape: f32[4,4], index: 0, kind: input, shape index: {}]
  %s1 = inlined_call_operand.vmem [shape: f32[16,1], index: 1, kind: output, shape index: {}]
  $region1: #{tile.0} parent=0
    #allocation0 [shape = 'u8[4096]{0}', space=vmem, size = 0x1000, scoped, tag = 'scoped mem for input reshape']
    %s3 = sshllo.u32 0, 4
    %v4 = vld [vmem:[%s0] sm:%s3]
    %5 = vst [vmem:[#allocation0] sm:%s3] %v4
    %v6 = vld [vmem:[#allocation0] sm:$0xf]
    %vm7 = vcmask 7168
    %8 = vst.msk [vmem:[%s1] ss:$4 sm:$0xf] %vm7, %v6
    %v9 = vld [vmem:[#allocation0] sm:$0xf]
    %10 = vrot.lane.b32.xlu0 %v9, 127
    %v11 = vpop.permute.xlu0 %10
    %vm12 = vcmask 7168
    %s13 = scalar_lea.vmem %s1, 1
    %14 = vst.msk [vmem:[%s13] ss:$4 sm:$0xf] %vm12, %v11
    %v15 = vld [vmem:[#allocation0] sm:$0xf]
    %16 = vrot.lane.b32.xlu0 %v15, 126
    %v17 = vpop.permute.xlu0 %16
    %vm18 = vcmask 7168
    %s19 = scalar_lea.vmem %s1, 2
    %20 = vst.msk [vmem:[%s19] ss:$4 sm:$0xf] %vm18, %v17
    %v21 = vld [vmem:[#allocation0] sm:$0xf]
    %22 = vrot.lane.b32.xlu0 %v21, 125
    %v23 = vpop.permute.xlu0 %22
    %vm24 = vcmask 7168
    %s25 = scalar_lea.vmem %s1, 3
    %26 = vst.msk [vmem:[%s25] ss:$4 sm:$0xf] %vm24, %v23

// kernel: upblock_forward.2
$region0: #{upblock_forward.2}
  #allocation0 [shape = 'u32[]', space=smem, size = 0x4, offset = 0x4, fixed_abs, tag = 'smem constant byte address 0x4 - core index']
  #allocation1 [shape = 'u32[144,128]{1,0:T(1,128)}', space=vmem, size = 0x12000, scoped, tag = 'internal scratch']
  %s0 = inlined_call_operand.vmem [shape: f32[8,128], index: 0, kind: input, shape index: {}]
  %s1 = inlined_call_operand.vmem [shape: bf16[16,8], index: 1, kind: input, shape index: {}]
  %s2 = inlined_call_operand.vmem [shape: f32[16,1], index: 2, kind: input, shape index: {}]
  %s3 = inlined_call_operand.vmem [shape: bf16[16,128], index: 3, kind: output, shape index: {}]
  %s4 = sld [smem:[#allocation0]]
  $region22: #{upblock_forward.2} parent=0
    _
  %s6 = ssub.s32 1, %s4
  %s7 = scalar_select 0, %s6, %s4
  // Predicated region
  $region2: #{upblock_forward.2} parent=0 // pred_check
    _
  $region3: #{upblock_forward.2} parent=0 // pred_check_branch
    %9 = sbr.rel (0) target = $region5
  $region4: #{upblock_forward.2} parent=0 // pred_region
    _
  $region5: #{upblock_forward.2} parent=0 // pred_fallthru
    _
  // Predicated region
  $region6: #{upblock_forward.2} parent=0 // pred_check
    _
  $region7: #{upblock_forward.2} parent=0 // pred_check_branch
    %11 = sbr.rel (0) target = $region9
  $region8: #{upblock_forward.2} parent=0 // pred_region
    _
  $region9: #{upblock_forward.2} parent=0 // pred_fallthru
    _
  // Predicated region
  $region10: #{upblock_forward.2} parent=0 // pred_check
    _
  $region11: #{upblock_forward.2} parent=0 // pred_check_branch
    %13 = sbr.rel (0) target = $region13
  $region12: #{upblock_forward.2} parent=0 // pred_region
    _
  $region13: #{upblock_forward.2} parent=0 // pred_fallthru
    _
  %v15 = vld [vmem:[%s1] sm:$0xf]
  %v16 = vld [vmem:[%s1 + $0x4] sm:$0xf]
  %v17 = vld [vmem:[%s0] sm:$0xff]
  %v18 = vpack.c.bf16 %v17, %v17
  %v19 = vld [vmem:[%s2] sm:$0xff]
  %v20 = vld [vmem:[%s2 + $0x8] sm:$0xff]
  %22 = vset.pattern.permute.xlu0 0
  %23 = vperm.xlu0 %22, %v19
  %v24 = vpop.permute.xlu0 %23
  %27 = vset.pattern.permute.xlu0 0
  %28 = vperm.xlu0 %27, %v20
  %v29 = vpop.permute.xlu0 %28
  %v33 = vunpack.c.l.b16 %v15
  %v34 = vunpack.c.l.b16 %v16
  %v35 = vpack.c.b16 %v34, %v33
  %vm36 = vcmask 64512
  %v38 = vsel %vm36, %v35, 0
  %vm40 = vcmask 1043456
  %v42 = vsel %vm40, %v18, 0
  %44 = vmatprep.subr.bf16.mxu0 0
  %45 = vmatpush1.bf16.msra.mxu0 %v42
  %46 = vmatprep.subr.bf16.mxu0 0
  %47 = vmatpush1.bf16.msra.mxu0 0
  %48 = vmatprep.subr.bf16.mxu0 0
  %49 = vmatpush1.bf16.msra.mxu0 0
  %50 = vmatprep.subr.bf16.mxu0 0
  %51 = vmatpush1.bf16.msra.mxu0 0
  %52 = vmatprep.subr.bf16.mxu0 0
  %53 = vmatpush1.bf16.msra.mxu0 0
  %54 = vmatprep.subr.bf16.mxu0 0
  %55 = vmatpush1.bf16.msra.mxu0 0
  %56 = vmatprep.subr.bf16.mxu0 0
  %57 = vmatpush1.bf16.msra.mxu0 0
  %58 = vmatprep.subr.bf16.mxu0 0
  %59 = vmatpush1.bf16.msra.mxu0 0
  %60 = vmatprep.subr.bf16.mxu0 0
  %61 = vmatpush1.bf16.msra.mxu0 0
  %62 = vmatprep.subr.bf16.mxu0 0
  %63 = vmatpush1.bf16.msra.mxu0 0
  %64 = vmatprep.subr.bf16.mxu0 0
  %65 = vmatpush1.bf16.msra.mxu0 0
  %66 = vmatprep.subr.bf16.mxu0 0
  %67 = vmatpush1.bf16.msra.mxu0 0
  %68 = vmatprep.subr.bf16.mxu0 0
  %69 = vmatpush1.bf16.msra.mxu0 0
  %70 = vmatprep.subr.bf16.mxu0 0
  %71 = vmatpush1.bf16.msra.mxu0 0
  %72 = vmatprep.subr.bf16.mxu0 0
  %73 = vmatpush1.bf16.msra.mxu0 0
  %74 = vmatprep.subr.bf16.mxu0 0
  %75 = vmatpush1.bf16.msra.mxu0 0
  %76 = vmatprep.mubr.bf16.mxu0 0
  %77 = vmatmul.mubr.bf16.gmra.mrb[0].mxu0 %v38
  %v78 = vpop.f32.mrb[0].mxu0
  %v79 = vadd.f32 %v24, %v78
  %v80 = vpop.f32.mrb[0].mxu0
  %v81 = vpop.f32.mrb[0].mxu0
  %v82 = vadd.f32 %v29, %v81
  %v83 = vpop.f32.mrb[0].mxu0
  %84 = vdwg.mxu0
  %v85 = vpack.c.bf16 %v82, %v79
  %v87 = vunpack.c.l.b16 %v85
  %v88 = vunpack.c.h.b16 %v85
  %v89 = vpack.c.b16 %v87, %v87
  %v90 = vpack.c.b16 %v88, %v88
  %93 = vst [vmem:[%s3] sm:$0xf] %v89
  %94 = vst [vmem:[%s3 + $0x4] sm:$0xf] %v90
  // Predicated region
  $region14: #{upblock_forward.2} parent=0 // pred_check
    _
  $region15: #{upblock_forward.2} parent=0 // pred_check_branch
    %96 = sbr.rel (0) target = $region17
  $region16: #{upblock_forward.2} parent=0 // pred_region
    _
  $region17: #{upblock_forward.2} parent=0 // pred_fallthru
    _
  // Predicated region
  $region18: #{upblock_forward.2} parent=0 // pred_check
    _
  $region19: #{upblock_forward.2} parent=0 // pred_check_branch
    %98 = sbr.rel (0) target = $region21
  $region20: #{upblock_forward.2} parent=0 // pred_region
    _
  $region21: #{upblock_forward.2} parent=0 // pred_fallthru
    _

// kernel: upblock_forward.3
$region0: #{upblock_forward.3}
  #allocation0 [shape = 'u32[]', space=smem, size = 0x4, offset = 0x4, fixed_abs, tag = 'smem constant byte address 0x4 - core index']
  #allocation1 [shape = 'u32[144,128]{1,0:T(1,128)}', space=vmem, size = 0x12000, scoped, tag = 'internal scratch']
  #allocation2 [shape = 'bf16[144,256]{1,0:T(16,128)(2,1)}', space=vmem, size = 0x12000, scoped, tag = 'scratch operand']
  #allocation3 [shape = 'bf16[72,256]{1,0:T(8,128)(2,1)}', space=vmem, size = 0x9000, scoped, tag = 'scratch operand']
  %s0 = inlined_call_operand.vmem [shape: f32[2,4,256], index: 0, kind: input, shape index: {}]
  %s1 = inlined_call_operand.vmem [shape: bf16[2,4,256], index: 1, kind: input, shape index: {}]
  %s2 = inlined_call_operand.vmem [shape: bf16[9,256], index: 2, kind: input, shape index: {}]
  %s3 = inlined_call_operand.vmem [shape: bf16[4,144], index: 3, kind: input, shape index: {}]
  %s4 = inlined_call_operand.vmem [shape: f32[4,1], index: 4, kind: input, shape index: {}]
  %s5 = inlined_call_operand.vmem [shape: bf16[4,256], index: 5, kind: input, shape index: {}]
  %s6 = inlined_call_operand.vmem [shape: bf16[4,256], index: 6, kind: input, shape index: {}]
  %s7 = inlined_call_operand.vmem [shape: bf16[4,72], index: 7, kind: input, shape index: {}]
  %s8 = inlined_call_operand.vmem [shape: f32[4,1], index: 8, kind: input, shape index: {}]
  %s9 = inlined_call_operand.vmem [shape: bf16[4,256], index: 9, kind: input, shape index: {}]
  %s10 = inlined_call_operand.vmem [shape: bf16[4,256], index: 10, kind: input, shape index: {}]
  %s11 = inlined_call_operand.vmem [shape: f32[2,4,256], index: 11, kind: output, shape index: {}]
  %s12 = sld [smem:[#allocation0]]
  $region81: #{upblock_forward.3} parent=0
    _
  %s14 = ssub.s32 1, %s12
  %s15 = scalar_select 0, %s14, %s12
  loop: start=0, step=1, limit=4
  $region2: #{upblock_forward.3} parent=0 // loop_pre_header
    _
  $region3: #{upblock_forward.3} parent=0 // loop_header
    %s17 = sphi 0, %s21
    %p18 = scmp.ge.s32.totalorder %s17, 4
    %s27 = sphi 0, %s29
    %s30 = sphi 0, %s27
    %s31 = sphi 0, %s30
    %s47 = sphi 0, %s31
    %s53 = sphi 0, %s55
    %s56 = sphi 0, %s53
    %s57 = sphi 0, %s56
    %s73 = sphi 0, %s57
    %s77 = sphi 0, %s77
    %s79 = sphi 0, %s77
    %s80 = sphi 0, %s79
    %s94 = sphi 0, %s80
    %s98 = sphi 0, %s98
    %s100 = sphi 0, %s98
    %s101 = sphi 0, %s100
    %s115 = sphi 0, %s101
    %s119 = sphi 0, %s119
    %s121 = sphi 0, %s119
    %s122 = sphi 0, %s121
    %s136 = sphi 0, %s122
    %s140 = sphi 0, %s140
    %s142 = sphi 0, %s140
    %s143 = sphi 0, %s142
    %s157 = sphi 0, %s143
    %s161 = sphi 0, %s161
    %s163 = sphi 0, %s161
    %s164 = sphi 0, %s163
    %s178 = sphi 0, %s164
    %s182 = sphi 0, %s182
    %s184 = sphi 0, %s182
    %s185 = sphi 0, %s184
    %s199 = sphi 0, %s185
    %s203 = sphi 0, %s203
    %s205 = sphi 0, %s203
    %s206 = sphi 0, %s205
    %s220 = sphi 0, %s206
    %s224 = sphi 0, %s224
    %s226 = sphi 0, %s224
    %s227 = sphi 0, %s226
    %s241 = sphi 0, %s227
    %s245 = sphi 0, %s245
    %s247 = sphi 0, %s245
    %s248 = sphi 0, %s247
    %s262 = sphi 0, %s248
    %s268 = sphi 0, %s270
    %s271 = sphi 0, %s268
    %s272 = sphi 0, %s271
    %s288 = sphi 0, %s272
  $region4: #{upblock_forward.3} parent=0 // loop_header_branch
    %20 = sbr.rel (%p18) target = $region8
  $region5: #{upblock_forward.3} parent=0 // loop_body
    %s22 = ssub.s32 %s17, 1
    %s23 = ssub.s32 %s17, 2
    %s24 = sadd.s32 %s17, 1
    %s25 = ssub.s32 %s17, %s24
    %p26 = scmp.eq.s32.totalorder %s25, 0
    %s28 = sadd.s32 %s27, 1
    %s29 = scalar_select %p26, %s27, %s28
    %p32 = pneg %p26
    %p33 = scmp.eq.s32.totalorder %s17, 1
    %p34 = por %p32, %p33
    %p35 = scmp.ne.s32.totalorder %s27, %s30
    %p36 = scmp.eq.s32.totalorder %s17, 0
    %p37 = por %p35, %p36
    %p38 = scmp.ne.s32.totalorder %s27, %s30
    %p39 = scmp.eq.s32.totalorder %s22, 1
    %p40 = por %p38, %p39
    %p41 = scmp.ne.s32.totalorder %s30, %s31
    %p42 = scmp.eq.s32.totalorder %s22, 0
    %p43 = por %p41, %p42
    %p44 = scmp.ne.s32.totalorder %s30, %s31
    %p45 = scmp.eq.s32.totalorder %s23, 1
    %p46 = por %p44, %p45
    %p48 = scmp.ne.s32.totalorder %s31, %s47
    %p49 = scmp.eq.s32.totalorder %s23, 0
    %p50 = por %p48, %p49
    %s51 = ssub.s32 %s17, %s24
    %p52 = scmp.eq.s32.totalorder %s51, 0
    %s54 = sadd.s32 %s53, 1
    %s55 = scalar_select %p52, %s53, %s54
    %p58 = pneg %p52
    %p59 = scmp.eq.s32.totalorder %s17, 1
    %p60 = por %p58, %p59
    %p61 = scmp.ne.s32.totalorder %s53, %s56
    %p62 = scmp.eq.s32.totalorder %s17, 0
    %p63 = por %p61, %p62
    %p64 = scmp.ne.s32.totalorder %s53, %s56
    %p65 = scmp.eq.s32.totalorder %s22, 1
    %p66 = por %p64, %p65
    %p67 = scmp.ne.s32.totalorder %s56, %s57
    %p68 = scmp.eq.s32.totalorder %s22, 0
    %p69 = por %p67, %p68
    %p70 = scmp.ne.s32.totalorder %s56, %s57
    %p71 = scmp.eq.s32.totalorder %s23, 1
    %p72 = por %p70, %p71
    %p74 = scmp.ne.s32.totalorder %s57, %s73
    %p75 = scmp.eq.s32.totalorder %s23, 0
    %p76 = por %p74, %p75
    %s78 = sadd.s32 %s77, 1
    %p81 = scmp.eq.s32.totalorder %s17, 1
    %p82 = scmp.ne.s32.totalorder %s77, %s79
    %p83 = scmp.eq.s32.totalorder %s17, 0
    %p84 = por %p82, %p83
    %p85 = scmp.ne.s32.totalorder %s77, %s79
    %p86 = scmp.eq.s32.totalorder %s22, 1
    %p87 = por %p85, %p86
    %p88 = scmp.ne.s32.totalorder %s79, %s80
    %p89 = scmp.eq.s32.totalorder %s22, 0
    %p90 = por %p88, %p89
    %p91 = scmp.ne.s32.totalorder %s79, %s80
    %p92 = scmp.eq.s32.totalorder %s23, 1
    %p93 = por %p91, %p92
    %p95 = scmp.ne.s32.totalorder %s80, %s94
    %p96 = scmp.eq.s32.totalorder %s23, 0
    %p97 = por %p95, %p96
    %s99 = sadd.s32 %s98, 1
    %p102 = scmp.eq.s32.totalorder %s17, 1
    %p103 = scmp.ne.s32.totalorder %s98, %s100
    %p104 = scmp.eq.s32.totalorder %s17, 0
    %p105 = por %p103, %p104
    %p106 = scmp.ne.s32.totalorder %s98, %s100
    %p107 = scmp.eq.s32.totalorder %s22, 1
    %p108 = por %p106, %p107
    %p109 = scmp.ne.s32.totalorder %s100, %s101
    %p110 = scmp.eq.s32.totalorder %s22, 0
    %p111 = por %p109, %p110
    %p112 = scmp.ne.s32.totalorder %s100, %s101
    %p113 = scmp.eq.s32.totalorder %s23, 1
    %p114 = por %p112, %p113
    %p116 = scmp.ne.s32.totalorder %s101, %s115
    %p117 = scmp.eq.s32.totalorder %s23, 0
    %p118 = por %p116, %p117
    %s120 = sadd.s32 %s119, 1
    %p123 = scmp.eq.s32.totalorder %s17, 1
    %p124 = scmp.ne.s32.totalorder %s119, %s121
    %p125 = scmp.eq.s32.totalorder %s17, 0
    %p126 = por %p124, %p125
    %p127 = scmp.ne.s32.totalorder %s119, %s121
    %p128 = scmp.eq.s32.totalorder %s22, 1
    %p129 = por %p127, %p128
    %p130 = scmp.ne.s32.totalorder %s121, %s122
    %p131 = scmp.eq.s32.totalorder %s22, 0
    %p132 = por %p130, %p131
    %p133 = scmp.ne.s32.totalorder %s121, %s122
    %p134 = scmp.eq.s32.totalorder %s23, 1
    %p135 = por %p133, %p134
    %p137 = scmp.ne.s32.totalorder %s122, %s136
    %p138 = scmp.eq.s32.totalorder %s23, 0
    %p139 = por %p137, %p138
    %s141 = sadd.s32 %s140, 1
    %p144 = scmp.eq.s32.totalorder %s17, 1
    %p145 = scmp.ne.s32.totalorder %s140, %s142
    %p146 = scmp.eq.s32.totalorder %s17, 0
    %p147 = por %p145, %p146
    %p148 = scmp.ne.s32.totalorder %s140, %s142
    %p149 = scmp.eq.s32.totalorder %s22, 1
    %p150 = por %p148, %p149
    %p151 = scmp.ne.s32.totalorder %s142, %s143
    %p152 = scmp.eq.s32.totalorder %s22, 0
    %p153 = por %p151, %p152
    %p154 = scmp.ne.s32.totalorder %s142, %s143
    %p155 = scmp.eq.s32.totalorder %s23, 1
    %p156 = por %p154, %p155
    %p158 = scmp.ne.s32.totalorder %s143, %s157
    %p159 = scmp.eq.s32.totalorder %s23, 0
    %p160 = por %p158, %p159
    %s162 = sadd.s32 %s161, 1
    %p165 = scmp.eq.s32.totalorder %s17, 1
    %p166 = scmp.ne.s32.totalorder %s161, %s163
    %p167 = scmp.eq.s32.totalorder %s17, 0
    %p168 = por %p166, %p167
    %p169 = scmp.ne.s32.totalorder %s161, %s163
    %p170 = scmp.eq.s32.totalorder %s22, 1
    %p171 = por %p169, %p170
    %p172 = scmp.ne.s32.totalorder %s163, %s164
    %p173 = scmp.eq.s32.totalorder %s22, 0
    %p174 = por %p172, %p173
    %p175 = scmp.ne.s32.totalorder %s163, %s164
    %p176 = scmp.eq.s32.totalorder %s23, 1
    %p177 = por %p175, %p176
    %p179 = scmp.ne.s32.totalorder %s164, %s178
    %p180 = scmp.eq.s32.totalorder %s23, 0
    %p181 = por %p179, %p180
    %s183 = sadd.s32 %s182, 1
    %p186 = scmp.eq.s32.totalorder %s17, 1
    %p187 = scmp.ne.s32.totalorder %s182, %s184
    %p188 = scmp.eq.s32.totalorder %s17, 0
    %p189 = por %p187, %p188
    %p190 = scmp.ne.s32.totalorder %s182, %s184
    %p191 = scmp.eq.s32.totalorder %s22, 1
    %p192 = por %p190, %p191
    %p193 = scmp.ne.s32.totalorder %s184, %s185
    %p194 = scmp.eq.s32.totalorder %s22, 0
    %p195 = por %p193, %p194
    %p196 = scmp.ne.s32.totalorder %s184, %s185
    %p197 = scmp.eq.s32.totalorder %s23, 1
    %p198 = por %p196, %p197
    %p200 = scmp.ne.s32.totalorder %s185, %s199
    %p201 = scmp.eq.s32.totalorder %s23, 0
    %p202 = por %p200, %p201
    %s204 = sadd.s32 %s203, 1
    %p207 = scmp.eq.s32.totalorder %s17, 1
    %p208 = scmp.ne.s32.totalorder %s203, %s205
    %p209 = scmp.eq.s32.totalorder %s17, 0
    %p210 = por %p208, %p209
    %p211 = scmp.ne.s32.totalorder %s203, %s205
    %p212 = scmp.eq.s32.totalorder %s22, 1
    %p213 = por %p211, %p212
    %p214 = scmp.ne.s32.totalorder %s205, %s206
    %p215 = scmp.eq.s32.totalorder %s22, 0
    %p216 = por %p214, %p215
    %p217 = scmp.ne.s32.totalorder %s205, %s206
    %p218 = scmp.eq.s32.totalorder %s23, 1
    %p219 = por %p217, %p218
    %p221 = scmp.ne.s32.totalorder %s206, %s220
    %p222 = scmp.eq.s32.totalorder %s23, 0
    %p223 = por %p221, %p222
    %s225 = sadd.s32 %s224, 1
    %p228 = scmp.eq.s32.totalorder %s17, 1
    %p229 = scmp.ne.s32.totalorder %s224, %s226
    %p230 = scmp.eq.s32.totalorder %s17, 0
    %p231 = por %p229, %p230
    %p232 = scmp.ne.s32.totalorder %s224, %s226
    %p233 = scmp.eq.s32.totalorder %s22, 1
    %p234 = por %p232, %p233
    %p235 = scmp.ne.s32.totalorder %s226, %s227
    %p236 = scmp.eq.s32.totalorder %s22, 0
    %p237 = por %p235, %p236
    %p238 = scmp.ne.s32.totalorder %s226, %s227
    %p239 = scmp.eq.s32.totalorder %s23, 1
    %p240 = por %p238, %p239
    %p242 = scmp.ne.s32.totalorder %s227, %s241
    %p243 = scmp.eq.s32.totalorder %s23, 0
    %p244 = por %p242, %p243
    %s246 = sadd.s32 %s245, 1
    %p249 = scmp.eq.s32.totalorder %s17, 1
    %p250 = scmp.ne.s32.totalorder %s245, %s247
    %p251 = scmp.eq.s32.totalorder %s17, 0
    %p252 = por %p250, %p251
    %p253 = scmp.ne.s32.totalorder %s245, %s247
    %p254 = scmp.eq.s32.totalorder %s22, 1
    %p255 = por %p253, %p254
    %p256 = scmp.ne.s32.totalorder %s247, %s248
    %p257 = scmp.eq.s32.totalorder %s22, 0
    %p258 = por %p256, %p257
    %p259 = scmp.ne.s32.totalorder %s247, %s248
    %p260 = scmp.eq.s32.totalorder %s23, 1
    %p261 = por %p259, %p260
    %p263 = scmp.ne.s32.totalorder %s248, %s262
    %p264 = scmp.eq.s32.totalorder %s23, 0
    %p265 = por %p263, %p264
    %s266 = ssub.s32 %s17, %s24
    %p267 = scmp.eq.s32.totalorder %s266, 0
    %s269 = sadd.s32 %s268, 1
    %s270 = scalar_select %p267, %s268, %s269
    %p273 = pneg %p267
    %p274 = scmp.eq.s32.totalorder %s17, 1
    %p275 = por %p273, %p274
    %p276 = scmp.ne.s32.totalorder %s268, %s271
    %p277 = scmp.eq.s32.totalorder %s17, 0
    %p278 = por %p276, %p277
    %p279 = scmp.ne.s32.totalorder %s268, %s271
    %p280 = scmp.eq.s32.totalorder %s22, 1
    %p281 = por %p279, %p280
    %p282 = scmp.ne.s32.totalorder %s271, %s272
    %p283 = scmp.eq.s32.totalorder %s22, 0
    %p284 = por %p282, %p283
    %p285 = scmp.ne.s32.totalorder %s271, %s272
    %p286 = scmp.eq.s32.totalorder %s23, 1
    %p287 = por %p285, %p286
    %p289 = scmp.ne.s32.totalorder %s272, %s288
    %p290 = scmp.eq.s32.totalorder %s23, 0
    %p291 = por %p289, %p290
    %p292 = scmp.le.s32.totalorder 1, %s17
    %p293 = scmp.lt.s32.totalorder %s17, 3
    %p294 = pnand %p292, %p293
    %p295 = pneg %p294
    // Predicated region
    $region9: #{upblock_forward.3} parent=5 // pred_check
      _
    $region10: #{upblock_forward.3} parent=5 // pred_check_branch
      %297 = sbr.rel (%p294) target = $region12
    $region11: #{upblock_forward.3} parent=5 // pred_region
      %s298 = ssub.s32 %s17, 1
      // Predicated region
      $region13: #{upblock_forward.3} parent=11 // pred_check
        %p299 = pneg %p90
      $region14: #{upblock_forward.3} parent=11 // pred_check_branch
        %301 = sbr.rel (%p299) target = $region16
      $region15: #{upblock_forward.3} parent=11 // pred_region
        _
      $region16: #{upblock_forward.3} parent=11 // pred_fallthru
        _
      // Predicated region
      $region17: #{upblock_forward.3} parent=11 // pred_check
        %p302 = pneg %p111
      $region18: #{upblock_forward.3} parent=11 // pred_check_branch
        %304 = sbr.rel (%p302) target = $region20
      $region19: #{upblock_forward.3} parent=11 // pred_region
        _
      $region20: #{upblock_forward.3} parent=11 // pred_fallthru
        _
      // Predicated region
      $region21: #{upblock_forward.3} parent=11 // pred_check
        %p305 = pneg %p132
      $region22: #{upblock_forward.3} parent=11 // pred_check_branch
        %307 = sbr.rel (%p305) target = $region24
      $region23: #{upblock_forward.3} parent=11 // pred_region
        _
      $region24: #{upblock_forward.3} parent=11 // pred_fallthru
        _
      // Predicated region
      $region25: #{upblock_forward.3} parent=11 // pred_check
        %p308 = pneg %p153
      $region26: #{upblock_forward.3} parent=11 // pred_check_branch
        %310 = sbr.rel (%p308) target = $region28
      $region27: #{upblock_forward.3} parent=11 // pred_region
        _
      $region28: #{upblock_forward.3} parent=11 // pred_fallthru
        _
      // Predicated region
      $region29: #{upblock_forward.3} parent=11 // pred_check
        %p311 = pneg %p174
      $region30: #{upblock_forward.3} parent=11 // pred_check_branch
        %313 = sbr.rel (%p311) target = $region32
      $region31: #{upblock_forward.3} parent=11 // pred_region
        _
      $region32: #{upblock_forward.3} parent=11 // pred_fallthru
        _
      // Predicated region
      $region33: #{upblock_forward.3} parent=11 // pred_check
        %p314 = pneg %p195
      $region34: #{upblock_forward.3} parent=11 // pred_check_branch
        %316 = sbr.rel (%p314) target = $region36
      $region35: #{upblock_forward.3} parent=11 // pred_region
        _
      $region36: #{upblock_forward.3} parent=11 // pred_fallthru
        _
      // Predicated region
      $region37: #{upblock_forward.3} parent=11 // pred_check
        %p317 = pneg %p216
      $region38: #{upblock_forward.3} parent=11 // pred_check_branch
        %319 = sbr.rel (%p317) target = $region40
      $region39: #{upblock_forward.3} parent=11 // pred_region
        _
      $region40: #{upblock_forward.3} parent=11 // pred_fallthru
        _
      // Predicated region
      $region41: #{upblock_forward.3} parent=11 // pred_check
        %p320 = pneg %p237
      $region42: #{upblock_forward.3} parent=11 // pred_check_branch
        %322 = sbr.rel (%p320) target = $region44
      $region43: #{upblock_forward.3} parent=11 // pred_region
        _
      $region44: #{upblock_forward.3} parent=11 // pred_fallthru
        _
      // Predicated region
      $region45: #{upblock_forward.3} parent=11 // pred_check
        %p323 = pneg %p258
      $region46: #{upblock_forward.3} parent=11 // pred_check_branch
        %325 = sbr.rel (%p323) target = $region48
      $region47: #{upblock_forward.3} parent=11 // pred_region
        _
      $region48: #{upblock_forward.3} parent=11 // pred_fallthru
        _
    $region12: #{upblock_forward.3} parent=5 // pred_fallthru
      _
    %p326 = scmp.lt.s32.totalorder %s17, 2
    // Predicated region
    $region49: #{upblock_forward.3} parent=5 // pred_check
      %p327 = pneg %p326
    $region50: #{upblock_forward.3} parent=5 // pred_check_branch
      %329 = sbr.rel (%p327) target = $region52
    $region51: #{upblock_forward.3} parent=5 // pred_region
      // Predicated region
      $region53: #{upblock_forward.3} parent=51 // pred_check
        %p330 = pneg %p37
      $region54: #{upblock_forward.3} parent=51 // pred_check_branch
        %332 = sbr.rel (%p330) target = $region56
      $region55: #{upblock_forward.3} parent=51 // pred_region
        %p333 = scmp.lt.s32.totalorder %s17, 1
        %s334 = scalar_select %p333, %s17, 1
        %s335 = smul.addr %s334, 2
        %s336 = smul.addr %s335, 4
        %s337 = scalar_lea.vmem %s0, %s336
      $region56: #{upblock_forward.3} parent=51 // pred_fallthru
        _
      // Predicated region
      $region57: #{upblock_forward.3} parent=51 // pred_check
        %p338 = pneg %p63
      $region58: #{upblock_forward.3} parent=51 // pred_check_branch
        %340 = sbr.rel (%p338) target = $region60
      $region59: #{upblock_forward.3} parent=51 // pred_region
        %p341 = scmp.lt.s32.totalorder %s17, 1
        %s342 = scalar_select %p341, %s17, 1
        %s343 = smul.addr %s342, 2
        %s344 = smul.addr %s343, 2
        %s345 = scalar_lea.vmem %s1, %s344
      $region60: #{upblock_forward.3} parent=51 // pred_fallthru
        _
    $region52: #{upblock_forward.3} parent=5 // pred_fallthru
      _
    %p346 = scmp.le.s32.totalorder 1, %s17
    %p347 = scmp.lt.s32.totalorder %s17, 3
    %p348 = pnand %p346, %p347
    %p349 = pneg %p348
    // Predicated region
    $region61: #{upblock_forward.3} parent=5 // pred_check
      _
    $region62: #{upblock_forward.3} parent=5 // pred_check_branch
      %351 = sbr.rel (%p348) target = $region64
    $region63: #{upblock_forward.3} parent=5 // pred_region
      %s352 = ssub.s32 %s17, 1
      %p353 = scmp.lt.s32.totalorder %s22, 1
      %s354 = scalar_select %p353, %s22, 1
      %s355 = smul.addr %s354, 2
      %s356 = smul.addr %s355, 4
      %s357 = scalar_lea.vmem %s0, %s356
      %p358 = pneg %p43
      %p359 = pneg %p40
      %p360 = scmp.lt.s32.totalorder %s22, 1
      %s361 = scalar_select %p360, %s22, 1
      %s362 = smul.addr %s361, 2
      %s363 = smul.addr %s362, 2
      %s364 = scalar_lea.vmem %s1, %s363
      %p365 = pneg %p69
      %p366 = pneg %p66
      %p367 = pneg %p90
      %p368 = pneg %p87
      %p369 = pneg %p111
      %p370 = pneg %p108
      %p371 = pneg %p132
      %p372 = pneg %p129
      %p373 = pneg %p153
      %p374 = pneg %p150
      %p375 = pneg %p174
      %p376 = pneg %p171
      %p377 = pneg %p195
      %p378 = pneg %p192
      %p379 = pneg %p216
      %p380 = pneg %p213
      %p381 = pneg %p237
      %p382 = pneg %p234
      %p383 = pneg %p258
      %p384 = pneg %p255
      %p385 = pneg %p284
      %p386 = pneg %p281
      %p387 = scmp.lt.s32.totalorder %s22, 1
      %s388 = scalar_select %p387, %s22, 1
      %s389 = smul.addr %s388, 2
      %s390 = smul.addr %s389, 4
      %s391 = scalar_lea.vmem %s11, %s390
      %p392 = scmp.lt.s32.totalorder %s22, 1
      %s393 = scalar_select %p392, %s22, 1
      %s394 = smul.addr %s393, 2
      %s395 = smul.addr %s394, 4
      %s396 = scalar_lea.vmem %s0, %s395
      %p397 = scmp.lt.s32.totalorder %s22, 1
      %s398 = scalar_select %p397, %s22, 1
      %s399 = smul.addr %s398, 2
      %s400 = smul.addr %s399, 2
      %s401 = scalar_lea.vmem %s1, %s400
      %p402 = scmp.lt.s32.totalorder %s22, 1
      %s403 = scalar_select %p402, %s22, 1
      %s404 = smul.addr %s403, 2
      %s405 = smul.addr %s404, 4
      %s406 = scalar_lea.vmem %s11, %s405
      %p408 = scmp.eq.s32.totalorder %s22, 0
      // Predicated region
      $region65: #{upblock_forward.3} parent=63 // pred_check
        %p409 = pneg %p408
      $region66: #{upblock_forward.3} parent=63 // pred_check_branch
        %411 = sbr.rel (%p409) target = $region68
      $region67: #{upblock_forward.3} parent=63 // pred_region
        %412 = vst [vmem:[#allocation2] sm:$0xc] 0
        %413 = vst [vmem:[#allocation2 + $0x8] sm:$0xc] 0
        %414 = vst [vmem:[#allocation2 + $0x40] sm:$0xc0] 0
        %415 = vst [vmem:[#allocation2 + $0x48] sm:$0xc0] 0
        %416 = vst [vmem:[#allocation3] sm:$0xcc] 0
        %417 = vst [vmem:[#allocation2] sm:$0xc0] 0
        %418 = vst [vmem:[#allocation2 + $0x8] sm:$0xc0] 0
        %419 = vst [vmem:[#allocation2 + $0x50] sm:$0xc] 0
        %420 = vst [vmem:[#allocation2 + $0x58] sm:$0xc] 0
        %421 = vst [vmem:[#allocation3 + $0x8] sm:$0xcc] 0
        %422 = vst [vmem:[#allocation2 + $0x10] sm:$0xc] 0
        %423 = vst [vmem:[#allocation2 + $0x18] sm:$0xc] 0
        %424 = vst [vmem:[#allocation2 + $0x50] sm:$0xc0] 0
        %425 = vst [vmem:[#allocation2 + $0x58] sm:$0xc0] 0
        %426 = vst [vmem:[#allocation3 + $0x10] sm:$0xcc] 0
        %427 = vst [vmem:[#allocation2 + $0x10] sm:$0xc0] 0
        %428 = vst [vmem:[#allocation2 + $0x18] sm:$0xc0] 0
        %429 = vst [vmem:[#allocation2 + $0x60] sm:$0xc] 0
        %430 = vst [vmem:[#allocation2 + $0x68] sm:$0xc] 0
        %431 = vst [vmem:[#allocation3 + $0x18] sm:$0xcc] 0
        %432 = vst [vmem:[#allocation2 + $0x20] sm:$0xc] 0
        %433 = vst [vmem:[#allocation2 + $0x28] sm:$0xc] 0
        %434 = vst [vmem:[#allocation2 + $0x60] sm:$0xc0] 0
        %435 = vst [vmem:[#allocation2 + $0x68] sm:$0xc0] 0
        %436 = vst [vmem:[#allocation3 + $0x20] sm:$0xcc] 0
        %437 = vst [vmem:[#allocation2 + $0x20] sm:$0xc0] 0
        %438 = vst [vmem:[#allocation2 + $0x28] sm:$0xc0] 0
        %439 = vst [vmem:[#allocation2 + $0x70] sm:$0xc] 0
        %440 = vst [vmem:[#allocation2 + $0x78] sm:$0xc] 0
        %441 = vst [vmem:[#allocation3 + $0x28] sm:$0xcc] 0
        %442 = vst [vmem:[#allocation2 + $0x30] sm:$0xc] 0
        %443 = vst [vmem:[#allocation2 + $0x38] sm:$0xc] 0
        %444 = vst [vmem:[#allocation2 + $0x70] sm:$0xc0] 0
        %445 = vst [vmem:[#allocation2 + $0x78] sm:$0xc0] 0
        %446 = vst [vmem:[#allocation3 + $0x30] sm:$0xcc] 0
        %447 = vst [vmem:[#allocation2 + $0x30] sm:$0xc0] 0
        %448 = vst [vmem:[#allocation2 + $0x38] sm:$0xc0] 0
        %449 = vst [vmem:[#allocation2 + $0x80] sm:$0xc] 0
        %450 = vst [vmem:[#allocation2 + $0x88] sm:$0xc] 0
        %451 = vst [vmem:[#allocation3 + $0x38] sm:$0xcc] 0
        %452 = vst [vmem:[#allocation2 + $0x40] sm:$0xc] 0
        %453 = vst [vmem:[#allocation2 + $0x48] sm:$0xc] 0
        %454 = vst [vmem:[#allocation2 + $0x80] sm:$0xc0] 0
        %455 = vst [vmem:[#allocation2 + $0x88] sm:$0xc0] 0
        %456 = vst [vmem:[#allocation3 + $0x40] sm:$0xcc] 0
      $region68: #{upblock_forward.3} parent=63 // pred_fallthru
        _
      %v457 = vld [vmem:[%s396] sm:$0xff]
      %v458 = vld [vmem:[%s401] sm:$0xf]
      %v459 = vunpack.c.l.bf16 %v458
      %v460 = vld [vmem:[%s2] sm:$0x11]
      %v462 = vcombine.high %v457, %v457
      %464 = vrot.lane.b32.xlu0 %v457, 17
      %v465 = vpop.permute.xlu0 %464
      %466 = vrot.lane.b32.xlu0 %v462, 17
      %v467 = vpop.permute.xlu0 %466
      %v468 = vlaneseq
      %v469 = vand.u32 %v468, 127
      %vm470 = vcmp.lt.s32.totalorder %v469, 17
      %v471 = vsel %vm470, %v465, %v467
      %v472 = vsel %vm470, %v467, %v465
      %v473 = vunpack.c.l.bf16 %v460
      %v474 = vunpack.c.h.bf16 %v460
      %v475 = vlaneseq
      %v476 = vshrl.u32 %v475, 7
      %v477 = vsub.s32 0, %v476
      %v478 = vrot.slane %v473, %v477
      %v479 = vlaneseq
      %v480 = vshrl.u32 %v479, 7
      %v481 = vsub.s32 0, %v480
      %v482 = vrot.slane %v474, %v481
      %v483 = vmul.f32 %v472, %v478
      %v484 = vmul.f32 %v471, %v482
      %v485 = vpack.c.bf16 %v483, %v483
      %v486 = vpack.c.bf16 %v484, %v484
      %487 = vst [vmem:[#allocation2] sm:$0x3] %v485
      %488 = vst [vmem:[#allocation2 + $0x8] sm:$0x3] %v486
      %v490 = vcombine.high %v459, %v459
      %492 = vrot.lane.b32.xlu0 %v459, 17
      %v493 = vpop.permute.xlu0 %492
      %494 = vrot.lane.b32.xlu0 %v490, 17
      %v495 = vpop.permute.xlu0 %494
      %v496 = vsel %vm470, %v493, %v495
      %v497 = vsel %vm470, %v495, %v493
      %v498 = vmul.f32 %v497, %v478
      %v499 = vmul.f32 %v496, %v482
      %v500 = vpack.c.bf16 %v498, %v498
      %v501 = vpack.c.bf16 %v499, %v499
      %v504 = vrot.slane %v500, 4
      %v505 = vrot.slane %v501, 4
      %508 = vst [vmem:[#allocation2 + $0x40] sm:$0x30] %v504
      %509 = vst [vmem:[#allocation2 + $0x48] sm:$0x30] %v505
      %v510 = vld [vmem:[%s2] sm:$0x11]
      %511 = vrot.lane.b32.xlu0 %v457, 16
      %v512 = vpop.permute.xlu0 %511
      %513 = vrot.lane.b32.xlu0 %v462, 16
      %v514 = vpop.permute.xlu0 %513
      %vm515 = vcmp.lt.s32.totalorder %v469, 16
      %v516 = vsel %vm515, %v512, %v514
      %v517 = vsel %vm515, %v514, %v512
      %v518 = vunpack.c.l.bf16 %v510
      %v519 = vunpack.c.h.bf16 %v510
      %v520 = vlaneseq
      %v521 = vshrl.u32 %v520, 7
      %v522 = vsub.s32 1, %v521
      %v523 = vrot.slane %v518, %v522
      %v524 = vlaneseq
      %v525 = vshrl.u32 %v524, 7
      %v526 = vsub.s32 1, %v525
      %v527 = vrot.slane %v519, %v526
      %v528 = vmul.f32 %v517, %v523
      %v529 = vmul.f32 %v516, %v527
      %v530 = vpack.c.bf16 %v528, %v528
      %v531 = vpack.c.bf16 %v529, %v529
      %v534 = vrot.slane %v530, 4
      %v535 = vrot.slane %v531, 4
      %538 = vst [vmem:[#allocation2] sm:$0x30] %v534
      %539 = vst [vmem:[#allocation2 + $0x8] sm:$0x30] %v535
      %540 = vrot.lane.b32.xlu0 %v459, 16
      %v541 = vpop.permute.xlu0 %540
      %542 = vrot.lane.b32.xlu0 %v490, 16
      %v543 = vpop.permute.xlu0 %542
      %v544 = vsel %vm515, %v541, %v543
      %v545 = vsel %vm515, %v543, %v541
      %v546 = vmul.f32 %v545, %v523
      %v547 = vmul.f32 %v544, %v527
      %v548 = vpack.c.bf16 %v546, %v546
      %v549 = vpack.c.bf16 %v547, %v547
      %550 = vst [vmem:[#allocation2 + $0x50] sm:$0x3] %v548
      %551 = vst [vmem:[#allocation2 + $0x58] sm:$0x3] %v549
      %v552 = vld [vmem:[%s2] sm:$0x22]
      %553 = vrot.lane.b32.xlu0 %v457, 15
      %v554 = vpop.permute.xlu0 %553
      %555 = vrot.lane.b32.xlu0 %v462, 15
      %v556 = vpop.permute.xlu0 %555
      %vm557 = vcmp.lt.s32.totalorder %v469, 15
      %v558 = vsel %vm557, %v554, %v556
      %v559 = vsel %vm557, %v556, %v554
      %v560 = vunpack.c.l.bf16 %v552
      %v561 = vunpack.c.h.bf16 %v552
      %v562 = vlaneseq
      %v563 = vshrl.u32 %v562, 7
      %v564 = vsub.s32 2, %v563
      %v565 = vrot.slane %v560, %v564
      %v566 = vlaneseq
      %v567 = vshrl.u32 %v566, 7
      %v568 = vsub.s32 2, %v567
      %v569 = vrot.slane %v561, %v568
      %v570 = vmul.f32 %v559, %v565
      %v571 = vmul.f32 %v558, %v569
      %v572 = vpack.c.bf16 %v570, %v570
      %v573 = vpack.c.bf16 %v571, %v571
      %574 = vst [vmem:[#allocation2 + $0x10] sm:$0x3] %v572
      %575 = vst [vmem:[#allocation2 + $0x18] sm:$0x3] %v573
      %576 = vrot.lane.b32.xlu0 %v459, 15
      %v577 = vpop.permute.xlu0 %576
      %578 = vrot.lane.b32.xlu0 %v490, 15
      %v579 = vpop.permute.xlu0 %578
      %v580 = vsel %vm557, %v577, %v579
      %v581 = vsel %vm557, %v579, %v577
      %v582 = vmul.f32 %v581, %v565
      %v583 = vmul.f32 %v580, %v569
      %v584 = vpack.c.bf16 %v582, %v582
      %v585 = vpack.c.bf16 %v583, %v583
      %v588 = vrot.slane %v584, 4
      %v589 = vrot.slane %v585, 4
      %592 = vst [vmem:[#allocation2 + $0x50] sm:$0x30] %v588
      %593 = vst [vmem:[#allocation2 + $0x58] sm:$0x30] %v589
      %v594 = vld [vmem:[%s2] sm:$0x22]
      %595 = vrot.lane.b32.xlu0 %v457, 1
      %v596 = vpop.permute.xlu0 %595
      %597 = vrot.lane.b32.xlu0 %v462, 1
      %v598 = vpop.permute.xlu0 %597
      %vm599 = vcmp.lt.s32.totalorder %v469, 1
      %v600 = vsel %vm599, %v596, %v598
      %v601 = vsel %vm599, %v598, %v596
      %v602 = vunpack.c.l.bf16 %v594
      %v603 = vunpack.c.h.bf16 %v594
      %v604 = vlaneseq
      %v605 = vshrl.u32 %v604, 7
      %v606 = vsub.s32 3, %v605
      %v607 = vrot.slane %v602, %v606
      %v608 = vlaneseq
      %v609 = vshrl.u32 %v608, 7
      %v610 = vsub.s32 3, %v609
      %v611 = vrot.slane %v603, %v610
      %v612 = vmul.f32 %v601, %v607
      %v613 = vmul.f32 %v600, %v611
      %v614 = vpack.c.bf16 %v612, %v612
      %v615 = vpack.c.bf16 %v613, %v613
      %v618 = vrot.slane %v614, 4
      %v619 = vrot.slane %v615, 4
      %622 = vst [vmem:[#allocation2 + $0x10] sm:$0x30] %v618
      %623 = vst [vmem:[#allocation2 + $0x18] sm:$0x30] %v619
      %624 = vrot.lane.b32.xlu0 %v459, 1
      %v625 = vpop.permute.xlu0 %624
      %626 = vrot.lane.b32.xlu0 %v490, 1
      %v627 = vpop.permute.xlu0 %626
      %v628 = vsel %vm599, %v625, %v627
      %v629 = vsel %vm599, %v627, %v625
      %v630 = vmul.f32 %v629, %v607
      %v631 = vmul.f32 %v628, %v611
      %v632 = vpack.c.bf16 %v630, %v630
      %v633 = vpack.c.bf16 %v631, %v631
      %634 = vst [vmem:[#allocation2 + $0x60] sm:$0x3] %v632
      %635 = vst [vmem:[#allocation2 + $0x68] sm:$0x3] %v633
      %v636 = vpack.c.bf16 %v457, %v457
      %v637 = vpack.c.bf16 %v462, %v462
      %638 = vst [vmem:[#allocation2 + $0x20] sm:$0x3] %v636
      %639 = vst [vmem:[#allocation2 + $0x28] sm:$0x3] %v637
      %v642 = vunpack.c.l.s4 1983009808
      %v643 = vunpack.c.0.s8 %v642
      %v644 = vlaneseq
      %v645 = vshrl.u32 %v644, 7
      %v646 = vsub.s32 %v643, %v645
      %v647 = vrot.slane %v458, %v646
      %v648 = vcombine.low %v647, %v647
      %651 = vst [vmem:[#allocation2 + $0x60] sm:$0x30] %v648
      %652 = vst [vmem:[#allocation2 + $0x68] sm:$0x30] %v647
      %v653 = vld [vmem:[%s2] sm:$0x44]
      %654 = vrot.lane.b32.xlu0 %v457, 127
      %v655 = vpop.permute.xlu0 %654
      %656 = vrot.lane.b32.xlu0 %v462, 127
      %v657 = vpop.permute.xlu0 %656
      %vm658 = vcmp.lt.s32.totalorder %v469, 127
      %v659 = vsel %vm658, %v655, %v657
      %v660 = vsel %vm658, %v657, %v655
      %v661 = vunpack.c.l.bf16 %v653
      %v662 = vunpack.c.h.bf16 %v653
      %v663 = vlaneseq
      %v664 = vshrl.u32 %v663, 7
      %v665 = vsub.s32 5, %v664
      %v666 = vrot.slane %v661, %v665
      %v667 = vlaneseq
      %v668 = vshrl.u32 %v667, 7
      %v669 = vsub.s32 5, %v668
      %v670 = vrot.slane %v662, %v669
      %v671 = vmul.f32 %v659, %v666
      %v672 = vmul.f32 %v660, %v670
      %v673 = vpack.c.bf16 %v671, %v671
      %v674 = vpack.c.bf16 %v672, %v672
      %v677 = vrot.slane %v673, 4
      %v678 = vrot.slane %v674, 4
      %681 = vst [vmem:[#allocation2 + $0x20] sm:$0x30] %v677
      %682 = vst [vmem:[#allocation2 + $0x28] sm:$0x30] %v678
      %683 = vrot.lane.b32.xlu0 %v459, 127
      %v684 = vpop.permute.xlu0 %683
      %685 = vrot.lane.b32.xlu0 %v490, 127
      %v686 = vpop.permute.xlu0 %685
      %v687 = vsel %vm658, %v684, %v686
      %v688 = vsel %vm658, %v686, %v684
      %v689 = vmul.f32 %v687, %v666
      %v690 = vmul.f32 %v688, %v670
      %v691 = vpack.c.bf16 %v689, %v689
      %v692 = vpack.c.bf16 %v690, %v690
      %693 = vst [vmem:[#allocation2 + $0x70] sm:$0x3] %v691
      %694 = vst [vmem:[#allocation2 + $0x78] sm:$0x3] %v692
      %v695 = vld [vmem:[%s2] sm:$0x88]
      %696 = vrot.lane.b32.xlu0 %v457, 113
      %v697 = vpop.permute.xlu0 %696
      %698 = vrot.lane.b32.xlu0 %v462, 113
      %v699 = vpop.permute.xlu0 %698
      %vm700 = vcmp.lt.s32.totalorder %v469, 113
      %v701 = vsel %vm700, %v697, %v699
      %v702 = vsel %vm700, %v699, %v697
      %v703 = vunpack.c.l.bf16 %v695
      %v704 = vunpack.c.h.bf16 %v695
      %v705 = vlaneseq
      %v706 = vshrl.u32 %v705, 7
      %v707 = vsub.s32 6, %v706
      %v708 = vrot.slane %v703, %v707
      %v709 = vlaneseq
      %v710 = vshrl.u32 %v709, 7
      %v711 = vsub.s32 6, %v710
      %v712 = vrot.slane %v704, %v711
      %v713 = vmul.f32 %v701, %v708
      %v714 = vmul.f32 %v702, %v712
      %v715 = vpack.c.bf16 %v713, %v713
      %v716 = vpack.c.bf16 %v714, %v714
      %717 = vst [vmem:[#allocation2 + $0x30] sm:$0x3] %v715
      %718 = vst [vmem:[#allocation2 + $0x38] sm:$0x3] %v716
      %719 = vrot.lane.b32.xlu0 %v459, 113
      %v720 = vpop.permute.xlu0 %719
      %721 = vrot.lane.b32.xlu0 %v490, 113
      %v722 = vpop.permute.xlu0 %721
      %v723 = vsel %vm700, %v720, %v722
      %v724 = vsel %vm700, %v722, %v720
      %v725 = vmul.f32 %v723, %v708
      %v726 = vmul.f32 %v724, %v712
      %v727 = vpack.c.bf16 %v725, %v725
      %v728 = vpack.c.bf16 %v726, %v726
      %v731 = vrot.slane %v727, 4
      %v732 = vrot.slane %v728, 4
      %735 = vst [vmem:[#allocation2 + $0x70] sm:$0x30] %v731
      %736 = vst [vmem:[#allocation2 + $0x78] sm:$0x30] %v732
      %v737 = vld [vmem:[%s2] sm:$0x88]
      %738 = vrot.lane.b32.xlu0 %v457, 112
      %v739 = vpop.permute.xlu0 %738
      %740 = vrot.lane.b32.xlu0 %v462, 112
      %v741 = vpop.permute.xlu0 %740
      %vm742 = vcmp.lt.s32.totalorder %v469, 112
      %v743 = vsel %vm742, %v739, %v741
      %v744 = vsel %vm742, %v741, %v739
      %v745 = vunpack.c.l.bf16 %v737
      %v746 = vunpack.c.h.bf16 %v737
      %v747 = vlaneseq
      %v748 = vshrl.u32 %v747, 7
      %v749 = vsub.s32 7, %v748
      %v750 = vrot.slane %v745, %v749
      %v751 = vlaneseq
      %v752 = vshrl.u32 %v751, 7
      %v753 = vsub.s32 7, %v752
      %v754 = vrot.slane %v746, %v753
      %v755 = vmul.f32 %v743, %v750
      %v756 = vmul.f32 %v744, %v754
      %v757 = vpack.c.bf16 %v755, %v755
      %v758 = vpack.c.bf16 %v756, %v756
      %v761 = vrot.slane %v757, 4
      %v762 = vrot.slane %v758, 4
      %765 = vst [vmem:[#allocation2 + $0x30] sm:$0x30] %v761
      %766 = vst [vmem:[#allocation2 + $0x38] sm:$0x30] %v762
      %767 = vrot.lane.b32.xlu0 %v459, 112
      %v768 = vpop.permute.xlu0 %767
      %769 = vrot.lane.b32.xlu0 %v490, 112
      %v770 = vpop.permute.xlu0 %769
      %v771 = vsel %vm742, %v768, %v770
      %v772 = vsel %vm742, %v770, %v768
      %v773 = vmul.f32 %v771, %v750
      %v774 = vmul.f32 %v772, %v754
      %v775 = vpack.c.bf16 %v773, %v773
      %v776 = vpack.c.bf16 %v774, %v774
      %777 = vst [vmem:[#allocation2 + $0x80] sm:$0x3] %v775
      %778 = vst [vmem:[#allocation2 + $0x88] sm:$0x3] %v776
      %v779 = vld [vmem:[%s2 + $0x8] sm:$0x11]
      %780 = vrot.lane.b32.xlu0 %v457, 111
      %v781 = vpop.permute.xlu0 %780
      %782 = vrot.lane.b32.xlu0 %v462, 111
      %v783 = vpop.permute.xlu0 %782
      %vm784 = vcmp.lt.s32.totalorder %v469, 111
      %v785 = vsel %vm784, %v781, %v783
      %v786 = vsel %vm784, %v783, %v781
      %v787 = vunpack.c.l.bf16 %v779
      %v788 = vunpack.c.h.bf16 %v779
      %v789 = vlaneseq
      %v790 = vshrl.u32 %v789, 7
      %v791 = vsub.s32 0, %v790
      %v792 = vrot.slane %v787, %v791
      %v793 = vlaneseq
      %v794 = vshrl.u32 %v793, 7
      %v795 = vsub.s32 0, %v794
      %v796 = vrot.slane %v788, %v795
      %v797 = vmul.f32 %v785, %v792
      %v798 = vmul.f32 %v786, %v796
      %v799 = vpack.c.bf16 %v797, %v797
      %v800 = vpack.c.bf16 %v798, %v798
      %801 = vst [vmem:[#allocation2 + $0x40] sm:$0x3] %v799
      %802 = vst [vmem:[#allocation2 + $0x48] sm:$0x3] %v800
      %803 = vrot.lane.b32.xlu0 %v459, 111
      %v804 = vpop.permute.xlu0 %803
      %805 = vrot.lane.b32.xlu0 %v490, 111
      %v806 = vpop.permute.xlu0 %805
      %v807 = vsel %vm784, %v804, %v806
      %v808 = vsel %vm784, %v806, %v804
      %v809 = vmul.f32 %v807, %v792
      %v810 = vmul.f32 %v808, %v796
      %v811 = vpack.c.bf16 %v809, %v809
      %v812 = vpack.c.bf16 %v810, %v810
      %v815 = vrot.slane %v811, 4
      %v816 = vrot.slane %v812, 4
      %819 = vst [vmem:[#allocation2 + $0x80] sm:$0x30] %v815
      %820 = vst [vmem:[#allocation2 + $0x88] sm:$0x30] %v816
      %v821 = vld [vmem:[%s3] sm:$0xf]
      %v822 = vld [vmem:[#allocation2] sm:$0xff]
      %v823 = vld [vmem:[#allocation2 + $0x8] sm:$0xff]
      %v824 = vld [vmem:[#allocation2 + $0x10] sm:$0xff]
      %v825 = vld [vmem:[#allocation2 + $0x18] sm:$0xff]
      %v826 = vld [vmem:[#allocation2 + $0x20] sm:$0xff]
      %v827 = vld [vmem:[#allocation2 + $0x28] sm:$0xff]
      %v828 = vld [vmem:[#allocation2 + $0x30] sm:$0xff]
      %v829 = vld [vmem:[#allocation2 + $0x38] sm:$0xff]
      %v830 = vld [vmem:[#allocation2 + $0x40] sm:$0xff]
      %v831 = vld [vmem:[#allocation2 + $0x48] sm:$0xff]
      %v832 = vld [vmem:[#allocation2 + $0x50] sm:$0xff]
      %v833 = vld [vmem:[#allocation2 + $0x58] sm:$0xff]
      %v834 = vld [vmem:[#allocation2 + $0x60] sm:$0xff]
      %v835 = vld [vmem:[#allocation2 + $0x68] sm:$0xff]
      %v836 = vld [vmem:[#allocation2 + $0x70] sm:$0xff]
      %v837 = vld [vmem:[#allocation2 + $0x78] sm:$0xff]
      %v838 = vld [vmem:[#allocation2 + $0x80] sm:$0xff]
      %v839 = vld [vmem:[#allocation2 + $0x88] sm:$0xff]
      %v840 = vld [vmem:[%s4] sm:$0xf]
      %842 = vset.pattern.permute.xlu0 0
      %843 = vperm.xlu0 %842, %v840
      %v844 = vpop.permute.xlu0 %843
      %v848 = vunpack.c.l.s4 1983009808
      %v849 = vunpack.c.0.s8 %v848
      %v850 = vlaneseq
      %v851 = vshrl.u32 %v850, 7
      %v852 = vsub.s32 %v849, %v851
      %v853 = vrot.slane %v821, %v852
      %v854 = vcombine.high %v853, %v853
      %vm856 = vcmask 130048
      %v858 = vsel %vm856, %v854, 0
      %860 = vmatprep.subr.bf16.mxu0 %v823
      %861 = vmatpush1.bf16.msra.mxu0 %v822
      %862 = vmatprep.subr.bf16.mxu0 %v825
      %863 = vmatpush1.bf16.msra.mxu0 %v824
      %864 = vmatprep.subr.bf16.mxu0 %v827
      %865 = vmatpush1.bf16.msra.mxu0 %v826
      %866 = vmatprep.subr.bf16.mxu0 %v829
      %867 = vmatpush1.bf16.msra.mxu0 %v828
      %868 = vmatprep.subr.bf16.mxu0 %v831
      %869 = vmatpush1.bf16.msra.mxu0 %v830
      %870 = vmatprep.subr.bf16.mxu0 %v833
      %871 = vmatpush1.bf16.msra.mxu0 %v832
      %872 = vmatprep.subr.bf16.mxu0 %v835
      %873 = vmatpush1.bf16.msra.mxu0 %v834
      %874 = vmatprep.subr.bf16.mxu0 %v837
      %875 = vmatpush1.bf16.msra.mxu0 %v836
      %876 = vmatprep.subr.bf16.mxu0 %v839
      %877 = vmatpush1.bf16.msra.mxu0 %v838
      %878 = vmatprep.subr.bf16.mxu0 0
      %879 = vmatpush1.bf16.msra.mxu0 0
      %880 = vmatprep.subr.bf16.mxu0 0
      %881 = vmatpush1.bf16.msra.mxu0 0
      %882 = vmatprep.subr.bf16.mxu0 0
      %883 = vmatpush1.bf16.msra.mxu0 0
      %884 = vmatprep.subr.bf16.mxu0 0
      %885 = vmatpush1.bf16.msra.mxu0 0
      %886 = vmatprep.subr.bf16.mxu0 0
      %887 = vmatpush1.bf16.msra.mxu0 0
      %888 = vmatprep.subr.bf16.mxu0 0
      %889 = vmatpush1.bf16.msra.mxu0 0
      %890 = vmatprep.subr.bf16.mxu0 0
      %891 = vmatpush1.bf16.msra.mxu0 0
      %892 = vmatprep.mubr.bf16.mxu0 %v858
      %893 = vmatmul.mubr.bf16.gmra.mrb[0].mxu0 %v853
      %v894 = vpop.f32.mrb[0].mxu0
      %v895 = vadd.f32 %v844, %v894
      %v896 = vpop.f32.mrb[0].mxu0
      %v897 = vadd.f32 %v844, %v896
      %v898 = vpop.f32.mrb[0].mxu0
      %v899 = vpop.f32.mrb[0].mxu0
      %900 = vdwg.mxu0
      %vm901 = vcmask 1043456
      %v902 = vsel %vm901, %v895, 0.0
      %v903 = vsel %vm901, %v897, 0.0
      %v904 = vadd.f32 %v902, %v903
      %905 = vadd.xlane.f32.xlu0 %v904
      %v906 = vpop.xlane.xlu0 %905
      %v907 = vrot.slane %v906, 4
      %v908 = vadd.f32 %v906, %v907
      %v909 = vrot.slane %v908, 2
      %v910 = vadd.f32 %v908, %v909
      %v911 = vrot.slane %v910, 1
      %v912 = vadd.f32 %v910, %v911
      %s913 = vtos %v912
      %s914 = smul.f32 %s913, 0.0009765625
      %v915 = vstv %s914
      %v916 = vsub.f32 %v895, %v915
      %v917 = vsub.f32 %v897, %v915
      %v918 = vmul.f32 %v916, %v916
      %v919 = vmul.f32 %v917, %v917
      %v920 = vsel %vm901, %v918, 0.0
      %v921 = vsel %vm901, %v919, 0.0
      %v922 = vadd.f32 %v920, %v921
      %923 = vadd.xlane.f32.xlu0 %v922
      %v924 = vpop.xlane.xlu0 %923
      %v925 = vrot.slane %v924, 4
      %v926 = vadd.f32 %v924, %v925
      %v927 = vrot.slane %v926, 2
      %v928 = vadd.f32 %v926, %v927
      %v929 = vrot.slane %v928, 1
      %v930 = vadd.f32 %v928, %v929
      %s931 = vtos %v930
      %s932 = smul.f32 %s931, 0.0009765625
      %s933 = sadd.f32 %s932, 1e-05
      %v934 = vstv %s933
      %v935 = vrsqrt.pop %v934
      %s936 = vtos %v935
      %v937 = vstv %s936
      %v938 = vmul.f32 %v916, %v937
      %v939 = vmul.f32 %v917, %v937
      %v940 = vld [vmem:[%s5] sm:$0xf]
      %v941 = vunpack.c.l.bf16 %v940
      %v943 = vcombine.high %v941, %v941
      %v945 = vmul.f32 %v938, %v941
      %v946 = vmul.f32 %v939, %v943
      %v947 = vld [vmem:[%s6] sm:$0xf]
      %v948 = vunpack.c.l.bf16 %v947
      %v950 = vcombine.high %v948, %v948
      %v952 = vadd.f32 %v945, %v948
      %v953 = vadd.f32 %v946, %v950
      %v954 = vmax.f32 %v952, 0.0
      %v955 = vmax.f32 %v953, 0.0
      %v956 = vld [vmem:[%s2] sm:$0x11]
      %957 = vrot.lane.b32.xlu0 %v954, 17
      %v958 = vpop.permute.xlu0 %957
      %959 = vrot.lane.b32.xlu0 %v955, 17
      %v960 = vpop.permute.xlu0 %959
      %v961 = vsel %vm470, %v958, %v960
      %v962 = vsel %vm470, %v960, %v958
      %v963 = vunpack.c.l.bf16 %v956
      %v964 = vunpack.c.h.bf16 %v956
      %v965 = vlaneseq
      %v966 = vshrl.u32 %v965, 7
      %v967 = vsub.s32 0, %v966
      %v968 = vrot.slane %v963, %v967
      %v969 = vlaneseq
      %v970 = vshrl.u32 %v969, 7
      %v971 = vsub.s32 0, %v970
      %v972 = vrot.slane %v964, %v971
      %v973 = vmul.f32 %v962, %v968
      %v974 = vmul.f32 %v961, %v972
      %v975 = vpack.c.bf16 %v973, %v973
      %v976 = vpack.c.bf16 %v974, %v974
      %v979 = vunpack.c.l.b16 %v975
      %v980 = vunpack.c.l.b16 %v976
      %v981 = vpack.c.b16 %v980, %v979
      %983 = vst [vmem:[#allocation3] sm:$0x33] %v981
      %v984 = vld [vmem:[%s2] sm:$0x11]
      %985 = vrot.lane.b32.xlu0 %v954, 16
      %v986 = vpop.permute.xlu0 %985
      %987 = vrot.lane.b32.xlu0 %v955, 16
      %v988 = vpop.permute.xlu0 %987
      %v989 = vsel %vm515, %v986, %v988
      %v990 = vsel %vm515, %v988, %v986
      %v991 = vunpack.c.l.bf16 %v984
      %v992 = vunpack.c.h.bf16 %v984
      %v993 = vlaneseq
      %v994 = vshrl.u32 %v993, 7
      %v995 = vsub.s32 1, %v994
      %v996 = vrot.slane %v991, %v995
      %v997 = vlaneseq
      %v998 = vshrl.u32 %v997, 7
      %v999 = vsub.s32 1, %v998
      %v1000 = vrot.slane %v992, %v999
      %v1001 = vmul.f32 %v990, %v996
      %v1002 = vmul.f32 %v989, %v1000
      %v1003 = vpack.c.bf16 %v1001, %v1001
      %v1004 = vpack.c.bf16 %v1002, %v1002
      %v1007 = vunpack.c.l.b16 %v1003
      %v1008 = vunpack.c.l.b16 %v1004
      %v1009 = vpack.c.b16 %v1008, %v1007
      %1011 = vst [vmem:[#allocation3 + $0x8] sm:$0x33] %v1009
      %v1012 = vld [vmem:[%s2] sm:$0x22]
      %1013 = vrot.lane.b32.xlu0 %v954, 15
      %v1014 = vpop.permute.xlu0 %1013
      %1015 = vrot.lane.b32.xlu0 %v955, 15
      %v1016 = vpop.permute.xlu0 %1015
      %v1017 = vsel %vm557, %v1014, %v1016
      %v1018 = vsel %vm557, %v1016, %v1014
      %v1019 = vunpack.c.l.bf16 %v1012
      %v1020 = vunpack.c.h.bf16 %v1012
      %v1021 = vlaneseq
      %v1022 = vshrl.u32 %v1021, 7
      %v1023 = vsub.s32 2, %v1022
      %v1024 = vrot.slane %v1019, %v1023
      %v1025 = vlaneseq
      %v1026 = vshrl.u32 %v1025, 7
      %v1027 = vsub.s32 2, %v1026
      %v1028 = vrot.slane %v1020, %v1027
      %v1029 = vmul.f32 %v1018, %v1024
      %v1030 = vmul.f32 %v1017, %v1028
      %v1031 = vpack.c.bf16 %v1029, %v1029
      %v1032 = vpack.c.bf16 %v1030, %v1030
      %v1035 = vunpack.c.l.b16 %v1031
      %v1036 = vunpack.c.l.b16 %v1032
      %v1037 = vpack.c.b16 %v1036, %v1035
      %1039 = vst [vmem:[#allocation3 + $0x10] sm:$0x33] %v1037
      %v1040 = vld [vmem:[%s2] sm:$0x22]
      %1041 = vrot.lane.b32.xlu0 %v954, 1
      %v1042 = vpop.permute.xlu0 %1041
      %1043 = vrot.lane.b32.xlu0 %v955, 1
      %v1044 = vpop.permute.xlu0 %1043
      %v1045 = vsel %vm599, %v1042, %v1044
      %v1046 = vsel %vm599, %v1044, %v1042
      %v1047 = vunpack.c.l.bf16 %v1040
      %v1048 = vunpack.c.h.bf16 %v1040
      %v1049 = vlaneseq
      %v1050 = vshrl.u32 %v1049, 7
      %v1051 = vsub.s32 3, %v1050
      %v1052 = vrot.slane %v1047, %v1051
      %v1053 = vlaneseq
      %v1054 = vshrl.u32 %v1053, 7
      %v1055 = vsub.s32 3, %v1054
      %v1056 = vrot.slane %v1048, %v1055
      %v1057 = vmul.f32 %v1046, %v1052
      %v1058 = vmul.f32 %v1045, %v1056
      %v1059 = vpack.c.bf16 %v1057, %v1057
      %v1060 = vpack.c.bf16 %v1058, %v1058
      %v1063 = vunpack.c.l.b16 %v1059
      %v1064 = vunpack.c.l.b16 %v1060
      %v1065 = vpack.c.b16 %v1064, %v1063
      %1067 = vst [vmem:[#allocation3 + $0x18] sm:$0x33] %v1065
      %v1068 = vpack.c.bf16 %v954, %v954
      %v1069 = vpack.c.bf16 %v955, %v955
      %v1072 = vunpack.c.l.b16 %v1068
      %v1073 = vunpack.c.l.b16 %v1069
      %v1074 = vpack.c.b16 %v1073, %v1072
      %1076 = vst [vmem:[#allocation3 + $0x20] sm:$0x33] %v1074
      %v1077 = vld [vmem:[%s2] sm:$0x44]
      %1078 = vrot.lane.b32.xlu0 %v954, 127
      %v1079 = vpop.permute.xlu0 %1078
      %1080 = vrot.lane.b32.xlu0 %v955, 127
      %v1081 = vpop.permute.xlu0 %1080
      %v1082 = vsel %vm658, %v1079, %v1081
      %v1083 = vsel %vm658, %v1081, %v1079
      %v1084 = vunpack.c.l.bf16 %v1077
      %v1085 = vunpack.c.h.bf16 %v1077
      %v1086 = vlaneseq
      %v1087 = vshrl.u32 %v1086, 7
      %v1088 = vsub.s32 5, %v1087
      %v1089 = vrot.slane %v1084, %v1088
      %v1090 = vlaneseq
      %v1091 = vshrl.u32 %v1090, 7
      %v1092 = vsub.s32 5, %v1091
      %v1093 = vrot.slane %v1085, %v1092
      %v1094 = vmul.f32 %v1082, %v1089
      %v1095 = vmul.f32 %v1083, %v1093
      %v1096 = vpack.c.bf16 %v1094, %v1094
      %v1097 = vpack.c.bf16 %v1095, %v1095
      %v1100 = vunpack.c.l.b16 %v1096
      %v1101 = vunpack.c.l.b16 %v1097
      %v1102 = vpack.c.b16 %v1101, %v1100
      %1104 = vst [vmem:[#allocation3 + $0x28] sm:$0x33] %v1102
      %v1105 = vld [vmem:[%s2] sm:$0x88]
      %1106 = vrot.lane.b32.xlu0 %v954, 113
      %v1107 = vpop.permute.xlu0 %1106
      %1108 = vrot.lane.b32.xlu0 %v955, 113
      %v1109 = vpop.permute.xlu0 %1108
      %v1110 = vsel %vm700, %v1107, %v1109
      %v1111 = vsel %vm700, %v1109, %v1107
      %v1112 = vunpack.c.l.bf16 %v1105
      %v1113 = vunpack.c.h.bf16 %v1105
      %v1114 = vlaneseq
      %v1115 = vshrl.u32 %v1114, 7
      %v1116 = vsub.s32 6, %v1115
      %v1117 = vrot.slane %v1112, %v1116
      %v1118 = vlaneseq
      %v1119 = vshrl.u32 %v1118, 7
      %v1120 = vsub.s32 6, %v1119
      %v1121 = vrot.slane %v1113, %v1120
      %v1122 = vmul.f32 %v1110, %v1117
      %v1123 = vmul.f32 %v1111, %v1121
      %v1124 = vpack.c.bf16 %v1122, %v1122
      %v1125 = vpack.c.bf16 %v1123, %v1123
      %v1128 = vunpack.c.l.b16 %v1124
      %v1129 = vunpack.c.l.b16 %v1125
      %v1130 = vpack.c.b16 %v1129, %v1128
      %1132 = vst [vmem:[#allocation3 + $0x30] sm:$0x33] %v1130
      %v1133 = vld [vmem:[%s2] sm:$0x88]
      %1134 = vrot.lane.b32.xlu0 %v954, 112
      %v1135 = vpop.permute.xlu0 %1134
      %1136 = vrot.lane.b32.xlu0 %v955, 112
      %v1137 = vpop.permute.xlu0 %1136
      %v1138 = vsel %vm742, %v1135, %v1137
      %v1139 = vsel %vm742, %v1137, %v1135
      %v1140 = vunpack.c.l.bf16 %v1133
      %v1141 = vunpack.c.h.bf16 %v1133
      %v1142 = vlaneseq
      %v1143 = vshrl.u32 %v1142, 7
      %v1144 = vsub.s32 7, %v1143
      %v1145 = vrot.slane %v1140, %v1144
      %v1146 = vlaneseq
      %v1147 = vshrl.u32 %v1146, 7
      %v1148 = vsub.s32 7, %v1147
      %v1149 = vrot.slane %v1141, %v1148
      %v1150 = vmul.f32 %v1138, %v1145
      %v1151 = vmul.f32 %v1139, %v1149
      %v1152 = vpack.c.bf16 %v1150, %v1150
      %v1153 = vpack.c.bf16 %v1151, %v1151
      %v1156 = vunpack.c.l.b16 %v1152
      %v1157 = vunpack.c.l.b16 %v1153
      %v1158 = vpack.c.b16 %v1157, %v1156
      %1160 = vst [vmem:[#allocation3 + $0x38] sm:$0x33] %v1158
      %v1161 = vld [vmem:[%s2 + $0x8] sm:$0x11]
      %1162 = vrot.lane.b32.xlu0 %v954, 111
      %v1163 = vpop.permute.xlu0 %1162
      %1164 = vrot.lane.b32.xlu0 %v955, 111
      %v1165 = vpop.permute.xlu0 %1164
      %v1166 = vsel %vm784, %v1163, %v1165
      %v1167 = vsel %vm784, %v1165, %v1163
      %v1168 = vunpack.c.l.bf16 %v1161
      %v1169 = vunpack.c.h.bf16 %v1161
      %v1170 = vlaneseq
      %v1171 = vshrl.u32 %v1170, 7
      %v1172 = vsub.s32 0, %v1171
      %v1173 = vrot.slane %v1168, %v1172
      %v1174 = vlaneseq
      %v1175 = vshrl.u32 %v1174, 7
      %v1176 = vsub.s32 0, %v1175
      %v1177 = vrot.slane %v1169, %v1176
      %v1178 = vmul.f32 %v1166, %v1173
      %v1179 = vmul.f32 %v1167, %v1177
      %v1180 = vpack.c.bf16 %v1178, %v1178
      %v1181 = vpack.c.bf16 %v1179, %v1179
      %v1184 = vunpack.c.l.b16 %v1180
      %v1185 = vunpack.c.l.b16 %v1181
      %v1186 = vpack.c.b16 %v1185, %v1184
      %1188 = vst [vmem:[#allocation3 + $0x40] sm:$0x33] %v1186
      %v1189 = vld [vmem:[%s7] sm:$0x3]
      %v1190 = vld [vmem:[#allocation3] sm:$0xff]
      %v1191 = vld [vmem:[#allocation3 + $0x8] sm:$0xff]
      %v1192 = vld [vmem:[#allocation3 + $0x10] sm:$0xff]
      %v1193 = vld [vmem:[#allocation3 + $0x18] sm:$0xff]
      %v1194 = vld [vmem:[#allocation3 + $0x20] sm:$0xff]
      %v1195 = vld [vmem:[#allocation3 + $0x28] sm:$0xff]
      %v1196 = vld [vmem:[#allocation3 + $0x30] sm:$0xff]
      %v1197 = vld [vmem:[#allocation3 + $0x38] sm:$0xff]
      %v1198 = vld [vmem:[#allocation3 + $0x40] sm:$0xff]
      %v1199 = vld [vmem:[%s8] sm:$0xf]
      %1201 = vset.pattern.permute.xlu0 0
      %1202 = vperm.xlu0 %1201, %v1199
      %v1203 = vpop.permute.xlu0 %1202
      %v1214 = vunpack.c.l.b16 %v1190
      %v1215 = vunpack.c.h.b16 %v1190
      %v1216 = vunpack.c.l.b16 %v1191
      %v1217 = vunpack.c.h.b16 %v1191
      %v1218 = vunpack.c.l.b16 %v1192
      %v1219 = vunpack.c.h.b16 %v1192
      %v1220 = vunpack.c.l.b16 %v1193
      %v1221 = vunpack.c.h.b16 %v1193
      %v1222 = vunpack.c.l.b16 %v1194
      %v1223 = vunpack.c.h.b16 %v1194
      %v1224 = vunpack.c.l.b16 %v1195
      %v1225 = vunpack.c.h.b16 %v1195
      %v1226 = vunpack.c.l.b16 %v1196
      %v1227 = vunpack.c.h.b16 %v1196
      %v1228 = vunpack.c.l.b16 %v1197
      %v1229 = vunpack.c.h.b16 %v1197
      %v1230 = vunpack.c.l.b16 %v1198
      %v1231 = vunpack.c.h.b16 %v1198
      %v1232 = vpack.c.b16 %v1216, %v1214
      %v1233 = vpack.c.b16 %v1217, %v1215
      %v1234 = vpack.c.b16 %v1220, %v1218
      %v1235 = vpack.c.b16 %v1221, %v1219
      %v1236 = vpack.c.b16 %v1224, %v1222
      %v1237 = vpack.c.b16 %v1225, %v1223
      %v1238 = vpack.c.b16 %v1228, %v1226
      %v1239 = vpack.c.b16 %v1229, %v1227
      %v1240 = vpack.c.b16 %v1230, %v1230
      %v1241 = vpack.c.b16 %v1231, %v1231
      %vm1250 = vcmask 588800
      %v1252 = vsel %vm1250, %v1189, 0
      %v1255 = vsel %vm901, %v1240, 0
      %v1258 = vsel %vm901, %v1241, 0
      %1260 = vmatprep.subr.bf16.mxu0 %v1233
      %1261 = vmatpush1.bf16.msra.mxu0 %v1232
      %1262 = vmatprep.subr.bf16.mxu0 %v1235
      %1263 = vmatpush1.bf16.msra.mxu0 %v1234
      %1264 = vmatprep.subr.bf16.mxu0 %v1237
      %1265 = vmatpush1.bf16.msra.mxu0 %v1236
      %1266 = vmatprep.subr.bf16.mxu0 %v1239
      %1267 = vmatpush1.bf16.msra.mxu0 %v1238
      %1268 = vmatprep.subr.bf16.mxu0 %v1258
      %1269 = vmatpush1.bf16.msra.mxu0 %v1255
      %1270 = vmatprep.subr.bf16.mxu0 0
      %1271 = vmatpush1.bf16.msra.mxu0 0
      %1272 = vmatprep.subr.bf16.mxu0 0
      %1273 = vmatpush1.bf16.msra.mxu0 0
      %1274 = vmatprep.subr.bf16.mxu0 0
      %1275 = vmatpush1.bf16.msra.mxu0 0
      %1276 = vmatprep.subr.bf16.mxu0 0
      %1277 = vmatpush1.bf16.msra.mxu0 0
      %1278 = vmatprep.subr.bf16.mxu0 0
      %1279 = vmatpush1.bf16.msra.mxu0 0
      %1280 = vmatprep.subr.bf16.mxu0 0
      %1281 = vmatpush1.bf16.msra.mxu0 0
      %1282 = vmatprep.subr.bf16.mxu0 0
      %1283 = vmatpush1.bf16.msra.mxu0 0
      %1284 = vmatprep.subr.bf16.mxu0 0
      %1285 = vmatpush1.bf16.msra.mxu0 0
      %1286 = vmatprep.subr.bf16.mxu0 0
      %1287 = vmatpush1.bf16.msra.mxu0 0
      %1288 = vmatprep.subr.bf16.mxu0 0
      %1289 = vmatpush1.bf16.msra.mxu0 0
      %1290 = vmatprep.subr.bf16.mxu0 0
      %1291 = vmatpush1.bf16.msra.mxu0 0
      %1292 = vmatprep.mubr.bf16.mxu0 0
      %1293 = vmatmul.mubr.bf16.gmra.mrb[0].mxu0 %v1252
      %v1294 = vpop.f32.mrb[0].mxu0
      %v1295 = vadd.f32 %v1203, %v1294
      %v1296 = vpop.f32.mrb[0].mxu0
      %v1297 = vadd.f32 %v1203, %v1296
      %v1298 = vpop.f32.mrb[0].mxu0
      %v1299 = vpop.f32.mrb[0].mxu0
      %1300 = vdwg.mxu0
      %v1301 = vsel %vm901, %v1295, 0.0
      %v1302 = vsel %vm901, %v1297, 0.0
      %v1303 = vadd.f32 %v1301, %v1302
      %1304 = vadd.xlane.f32.xlu0 %v1303
      %v1305 = vpop.xlane.xlu0 %1304
      %v1306 = vrot.slane %v1305, 4
      %v1307 = vadd.f32 %v1305, %v1306
      %v1308 = vrot.slane %v1307, 2
      %v1309 = vadd.f32 %v1307, %v1308
      %v1310 = vrot.slane %v1309, 1
      %v1311 = vadd.f32 %v1309, %v1310
      %s1312 = vtos %v1311
      %s1313 = smul.f32 %s1312, 0.0009765625
      %v1314 = vstv %s1313
      %v1315 = vsub.f32 %v1295, %v1314
      %v1316 = vsub.f32 %v1297, %v1314
      %v1317 = vmul.f32 %v1315, %v1315
      %v1318 = vmul.f32 %v1316, %v1316
      %v1319 = vsel %vm901, %v1317, 0.0
      %v1320 = vsel %vm901, %v1318, 0.0
      %v1321 = vadd.f32 %v1319, %v1320
      %1322 = vadd.xlane.f32.xlu0 %v1321
      %v1323 = vpop.xlane.xlu0 %1322
      %v1324 = vrot.slane %v1323, 4
      %v1325 = vadd.f32 %v1323, %v1324
      %v1326 = vrot.slane %v1325, 2
      %v1327 = vadd.f32 %v1325, %v1326
      %v1328 = vrot.slane %v1327, 1
      %v1329 = vadd.f32 %v1327, %v1328
      %s1330 = vtos %v1329
      %s1331 = smul.f32 %s1330, 0.0009765625
      %s1332 = sadd.f32 %s1331, 1e-05
      %v1333 = vstv %s1332
      %v1334 = vrsqrt.pop %v1333
      %s1335 = vtos %v1334
      %v1336 = vstv %s1335
      %v1337 = vmul.f32 %v1315, %v1336
      %v1338 = vmul.f32 %v1316, %v1336
      %v1339 = vld [vmem:[%s9] sm:$0xf]
      %v1340 = vunpack.c.l.bf16 %v1339
      %v1342 = vcombine.high %v1340, %v1340
      %v1344 = vmul.f32 %v1337, %v1340
      %v1345 = vmul.f32 %v1338, %v1342
      %v1346 = vld [vmem:[%s10] sm:$0xf]
      %v1347 = vunpack.c.l.bf16 %v1346
      %v1349 = vcombine.high %v1347, %v1347
      %v1351 = vadd.f32 %v1344, %v1347
      %v1352 = vadd.f32 %v1345, %v1349
      %v1353 = vmax.f32 %v1351, 0.0
      %v1354 = vmax.f32 %v1352, 0.0
      %v1357 = vcombine.low %v1353, %v1354
      %1359 = vst [vmem:[%s406] sm:$0xff] %v1357
      %p1360 = scmp.lt.s32.totalorder %s22, 1
      %s1361 = scalar_select %p1360, %s22, 1
      %s1362 = smul.addr %s1361, 2
      %s1363 = smul.addr %s1362, 4
      %s1364 = scalar_lea.vmem %s11, %s1363
      // Predicated region
      $region69: #{upblock_forward.3} parent=63 // pred_check
        %p1365 = pneg %p281
      $region70: #{upblock_forward.3} parent=63 // pred_check_branch
        %1367 = sbr.rel (%p1365) target = $region72
      $region71: #{upblock_forward.3} parent=63 // pred_region
        _
      $region72: #{upblock_forward.3} parent=63 // pred_fallthru
        _
    $region64: #{upblock_forward.3} parent=5 // pred_fallthru
      _
    %p1368 = scmp.le.s32.totalorder 2, %s17
    // Predicated region
    $region73: #{upblock_forward.3} parent=5 // pred_check
      %p1369 = pneg %p1368
    $region74: #{upblock_forward.3} parent=5 // pred_check_branch
      %1371 = sbr.rel (%p1369) target = $region76
    $region75: #{upblock_forward.3} parent=5 // pred_region
      %s1372 = ssub.s32 %s17, 2
      // Predicated region
      $region77: #{upblock_forward.3} parent=75 // pred_check
        %p1373 = pneg %p287
      $region78: #{upblock_forward.3} parent=75 // pred_check_branch
        %1375 = sbr.rel (%p1373) target = $region80
      $region79: #{upblock_forward.3} parent=75 // pred_region
        %p1376 = scmp.lt.s32.totalorder %s23, 1
        %s1377 = scalar_select %p1376, %s23, 1
        %s1378 = smul.addr %s1377, 2
        %s1379 = smul.addr %s1378, 4
        %s1380 = scalar_lea.vmem %s11, %s1379
      $region80: #{upblock_forward.3} parent=75 // pred_fallthru
        _
    $region76: #{upblock_forward.3} parent=5 // pred_fallthru
      _
  $region6: #{upblock_forward.3} parent=0 // loop_footer
    %s21 = sadd.s32 1, %s17
  $region7: #{upblock_forward.3} parent=0 // loop_footer_branch
    %16 = sbr.rel target = $region3
  $region8: #{upblock_forward.3} parent=0 // loop_exit
    _

</llo_original>
